<compile_context>
chip_gen: v7x
topology: tpu7x:2x2x1
jax: 0.10.0
libtpu: 0.0.40
codegen_flags: <defaults>
</compile_context>

<pallas_src>
import math
import functools

import jax
import jax.numpy as jnp
from jax.experimental import pallas as pl
from jax.experimental.pallas import tpu as pltpu

ATOM_N, ATOM_CA, ATOM_C, ATOM_CB = 0, 1, 2, 4


def _round_up(x, m):
    return ((x + m - 1) // m) * m


# ----------------------------- geometry glue (plain JAX) -----------------------------
def normalize_vector(v, axis=-1, eps=1e-6):
    return v / (jnp.linalg.norm(v, ord=2, axis=axis, keepdims=True) + eps)


def project_v2v(v, e, axis=-1):
    return jnp.sum(e * v, axis=axis, keepdims=True) * e


def construct_3d_basis(center, p1, p2):
    v1 = p1 - center
    e1 = normalize_vector(v1)
    v2 = p2 - center
    u2 = v2 - project_v2v(v2, e1)
    e2 = normalize_vector(u2)
    e3 = jnp.cross(e1, e2)
    return jnp.stack([e1, e2, e3], axis=-1)          # (N, L, 3, 3), columns [e1,e2,e3]


def global_to_local(R, t, q):
    # p = R^T (q - t);  q: (N, L, A, 3)
    qmt = q - t[:, :, None, :]
    return jnp.einsum('nlji,nlaj->nlai', R, qmt)


def get_pos_CB(pos14, atom_mask):
    mask_CB = atom_mask[:, :, ATOM_CB][..., None]
    return jnp.where(mask_CB, pos14[:, :, ATOM_CB], pos14[:, :, ATOM_CA])


def generate_positional_embedding(feat_dim):
    pos = jnp.arange(2, dtype=jnp.float32)[:, None]
    div_term = jnp.exp(jnp.arange(0, feat_dim, 2, dtype=jnp.float32)
                       * (-math.log(10000.0) / feat_dim))
    pe = jnp.zeros((2, feat_dim), jnp.float32)
    pe = pe.at[:, 0::2].set(jnp.sin(pos * div_term))
    pe = pe.at[:, 1::2].set(jnp.cos(pos * div_term))
    return pe


# ----------------------------- fused Pallas kernel -----------------------------
def _fused_kernel(F, H1P, crd_ref, feat_ref, tmat_ref, blkid_ref, tbl_ref,
                  w1_ref, w2_ref, w3_ref, w4_ref, consts_ref, out_ref):
    crd = crd_ref[...]                       # (tm, 42)  bf16 local coords
    feat = feat_ref[...]                     # (tm, 24)  bf16: [onehot(21) | mut | aa | 0]
    consts = consts_ref[...]                 # (4, H1P)  f32: b1, b2, b3, b4
    tm = crd.shape[0]
    FP = w2_ref.shape[1]

    # One-hot gather via one tiny f32 matmul:
    #   g = [E@W1_tail | pe0 + mut*(pe1-pe0) | c00 c01 c10 c11 c20 c21]
    g = jnp.dot(feat.astype(jnp.float32), tbl_ref[...],
                preferred_element_type=jnp.float32)          # (tm, TW) f32

    # Layer-1: replicate crd across the 21 aatype blocks (MXU), zero every block
    # except the row's aatype (VPU compare+select), then one dense matmul.
    crd_t = jnp.dot(crd, tmat_ref[...],
                    preferred_element_type=jnp.float32)      # (tm, KXP) f32, crd tiled
    aa_col = feat[:, 22:23].astype(jnp.float32)              # (tm, 1) aatype id
    x = jnp.where(aa_col == blkid_ref[...], crd_t, 0.0).astype(jnp.bfloat16)

    h = jnp.dot(x, w1_ref[...], preferred_element_type=jnp.float32)       # (tm, H1P)
    h = jnp.maximum(h + g[:, :H1P] + consts[0:1, :], 0.0)
    h = jnp.dot(h.astype(jnp.bfloat16), w2_ref[...],
                preferred_element_type=jnp.float32)                        # (tm, FP)
    h = jnp.maximum(h + consts[1:2, :FP], 0.0)
    h = jnp.dot(h.astype(jnp.bfloat16), w3_ref[...],
                preferred_element_type=jnp.float32)
    h = jnp.maximum(h + consts[2:3, :FP], 0.0)
    h = jnp.dot(h.astype(jnp.bfloat16), w4_ref[...],
                preferred_element_type=jnp.float32)
    h = h + consts[3:4, :FP]

    # add_mutation_mask: pe0 + mut*(pe1-pe0) already gathered into g (no select here)
    o = H1P
    res = h[:, :F] + g[:, o:o + F]

    # TODO(synk): InvariantPointAttention blocks and GAEncoder encoder_layer_{1,2,3}
    # are not defined in the provided reference source -> applied as identity maps.
    ipa = res
    o += F
    c00 = g[:, o + 0 * F:o + 1 * F]
    c01 = g[:, o + 1 * F:o + 2 * F]
    c10 = g[:, o + 2 * F:o + 3 * F]
    c11 = g[:, o + 3 * F:o + 4 * F]
    c20 = g[:, o + 4 * F:o + 5 * F]
    c21 = g[:, o + 5 * F:o + 6 * F]
    mix1 = c00 * res + c01 * ipa
    mix2 = c10 * mix1 + c11 * ipa                            # == local_state (GA identity)
    glob = c20 * mix2 + c21 * ipa                            # == global_state

    out_ref[:, 0:F] = mix2
    out_ref[:, F:2 * F] = glob
    ow = out_ref.shape[1]
    if 2 * F < ow:                                           # static; keep HBM deterministic
        out_ref[:, 2 * F:] = jnp.zeros((tm, ow - 2 * F), jnp.float32)


def fused_residue_encoder(crd, feat, folded, *, tile_m=512):
    """crd (M,42) bf16, feat (M,24) bf16 -> (loc (M,F) f32, glob (M,F) f32)."""
    M = crd.shape[0]
    F, H1P, OW = folded['F'], folded['H1P'], folded['OW']

    m8 = _round_up(M, 8)
    # big tiles (>=512 rows) but keep >=2 grid steps when possible (v7x: 2 TCs)
    tile_m = max(8, min(tile_m, _round_up(pl.cdiv(m8, 2), 8)))
    M_pad = _round_up(m8, tile_m)
    if M_pad != M:                                           # never silently drop tail rows
        pad = M_pad - M
        crd = jnp.pad(crd, ((0, pad), (0, 0)))
        feat = jnp.pad(feat, ((0, pad), (0, 0)))
    grid = (M_pad // tile_m,)

    def row(w):
        return pl.BlockSpec((tile_m, w), lambda i: (i, 0))

    def full(a):
        return pl.BlockSpec(a.shape, lambda i: (0, 0))

    kernel = functools.partial(_fused_kernel, F, H1P)
    out = pl.pallas_call(
        kernel,
        out_shape=jax.ShapeDtypeStruct((M_pad, OW), jnp.float32),
        grid=grid,
        in_specs=[row(crd.shape[1]), row(feat.shape[1]),
                  full(folded['tmat']), full(folded['blkid']), full(folded['tbl']),
                  full(folded['w1']), full(folded['w2']),
                  full(folded['w3']), full(folded['w4']), full(folded['consts'])],
        out_specs=row(OW),
        compiler_params=pltpu.CompilerParams(
            dimension_semantics=("parallel",),
            vmem_limit_bytes=32 * 1024 * 1024),
    )(crd, feat, folded['tmat'], folded['blkid'], folded['tbl'],
      folded['w1'], folded['w2'], folded['w3'], folded['w4'], folded['consts'])
    return out[:M, :F], out[:M, F:2 * F]


# ----------------------------- parameter init & one-time folding -----------------------------
def init_params(key, feat_dim, rel_dim, max_relpos):
    ks = jax.random.split(key, 8)
    d_in = 21 * 14 * 3 + feat_dim

    def lin(k, din, dout):
        kw, kb = jax.random.split(k)
        bound = 1.0 / math.sqrt(din)
        w = jax.random.uniform(kw, (din, dout), jnp.float32, -bound, bound)
        b = jax.random.uniform(kb, (1, dout), jnp.float32, -bound, bound)
        return w, b

    params = {
        'relpos_embedding': jax.random.normal(ks[0], (max_relpos * 2 + 2, rel_dim), jnp.float32),
        'aatype_embed': jax.random.normal(ks[1], (21, feat_dim), jnp.float32),
        'coefficient': jnp.ones((3, 2, 21, feat_dim), jnp.float32),   # torch.ones init
    }
    w1, b1 = lin(ks[2], d_in, feat_dim * 2)
    w2, b2 = lin(ks[3], feat_dim * 2, feat_dim)
    w3, b3 = lin(ks[4], feat_dim, feat_dim)
    w4, b4 = lin(ks[5], feat_dim, feat_dim)
    params['mlp'] = (w1, b1, w2, b2, w3, b3, w4, b4)
    return params


def fold_params(params, feat_dim):
    """One-time repack of the module weights for the fused kernel (outside the kernel)."""
    w1, b1, w2, b2, w3, b3, w4, b4 = params['mlp']
    F = feat_dim
    H1 = 2 * F
    H1P = _round_up(H1, 128)
    FP = _round_up(F, 128)
    KX = 21 * 42                       # 882 flat one-hot-expanded crd width
    KXP = _round_up(KX, 256)           # pre-pad K to 256-multiple for the v6e/v7x MXU
    TW = _round_up(H1P + 7 * F, 128)
    OW = _round_up(2 * F, 128)

    def padto(a, shape):
        return jnp.pad(a, [(0, s - d) for d, s in zip(a.shape, shape)])

    # Layer-1 crd part: original x layout is [crd_feat (aatype*42 + atom3) | aa_feat],
    # so w1[:882] is already the flat layout the in-kernel X uses.  Just zero-pad.
    w1c = jnp.zeros((KXP, H1P), jnp.float32).at[:KX, :H1].set(w1[:KX])

    # aa-embedding contribution folded:  onehot @ (E @ W1_tail)
    w1_aa = params['aatype_embed'] @ w1[KX:]                     # (21, H1)

    # Replication matrix:  crd_t = crd @ tmat,  crd_t[:, a*42+j] = crd[:, j]
    cols = jnp.arange(KX)
    tmat = jnp.zeros((42, KXP), jnp.float32).at[cols % 42, cols].set(1.0)

    # aatype block-id per lane of the expanded input (pad lanes never match any aatype)
    lane = jnp.arange(KXP)
    blkid = jnp.where(lane < KX, lane // 42, 1000).astype(jnp.float32)[None, :]

    # Gather table (f32, rows = [21 aatypes | mut | aa | pad]):
    #   cols [0, H1P)        : E @ W1_tail                 (per aatype)
    #   cols [H1P, H1P+F)    : mutation PE select: aatype rows -> pe0, mut row -> pe1-pe0
    #   cols [H1P+F, H1P+7F) : coefficients c00 c01 c10 c11 c20 c21 (per aatype)
    pe = generate_positional_embedding(F)
    coeff = params['coefficient']                                 # (3, 2, 21, F)
    tbl = jnp.zeros((24, TW), jnp.float32)
    tbl = tbl.at[:21, :H1].set(w1_aa)
    tbl = tbl.at[:21, H1P:H1P + F].set(jnp.broadcast_to(pe[0], (21, F)))
    tbl = tbl.at[21, H1P:H1P + F].set(pe[1] - pe[0])
    for k in range(6):
        s, t = divmod(k, 2)
        tbl = tbl.at[:21, H1P + (k + 1) * F:H1P + (k + 2) * F].set(coeff[s, t])

    consts = jnp.zeros((4, H1P), jnp.float32)
    consts = consts.at[0, :H1].set(b1[0])
    consts = consts.at[1, :F].set(b2[0])
    consts = consts.at[2, :F].set(b3[0])
    consts = consts.at[3, :F].set(b4[0])

    return {
        'F': F, 'H1P': H1P, 'FP': FP, 'KXP': KXP, 'TW': TW, 'OW': OW,
        'w1': w1c.astype(jnp.bfloat16),
        'tmat': tmat.astype(jnp.bfloat16),
        'blkid': blkid,                                   # f32
        'tbl': tbl,                                       # f32: coefficients / PE stay exact
        'w2': padto(w2, (H1P, FP)).astype(jnp.bfloat16),
        'w3': padto(w3, (FP, FP)).astype(jnp.bfloat16),
        'w4': padto(w4, (FP, FP)).astype(jnp.bfloat16),
        'consts': consts,                                 # f32
    }


# ----------------------------- model forward -----------------------------
def geo_ipa_encoder_forward(params, folded, complex_batch, mutation_mask, args):
    pos14 = complex_batch['pos14']
    aa = complex_batch['aa']
    seq = complex_batch['seq']
    chain = complex_batch['chain_seq']
    max_relpos = args['max_relpos']
    feat_dim = args['feat_dim']
    N, L = aa.shape

    mask_atom = jnp.all(complex_batch['pos14_mask'], axis=-1)         # (N, L, 14)

    # pair features (consumed only by IPA / GAEncoder, which are identity here)
    same_chain = chain[:, None, :] == chain[:, :, None]
    relpos = jnp.clip(seq[:, None, :] - seq[:, :, None], -max_relpos, max_relpos) + max_relpos
    relpos = jnp.where(same_chain, relpos, max_relpos * 2 + 1)
    pair_feat = params['relpos_embedding'][relpos]
    # TODO(synk): pair_feat / get_pos_CB feed only the undefined IPA / GAEncoder blocks.
    del pair_feat

    # PerResidueEncoder geometry (same CA/C/N frame as the outer R -> compute once)
    R = construct_3d_basis(pos14[:, :, ATOM_CA], pos14[:, :, ATOM_C], pos14[:, :, ATOM_N])
    t = pos14[:, :, ATOM_CA]
    crd14 = global_to_local(R, t, pos14)                               # (N, L, 14, 3)
    crd14 = jnp.where(mask_atom[..., None], crd14, 0.0)

    M = N * L
    crd = crd14.reshape(M, 14 * 3).astype(jnp.bfloat16)
    onehot = jax.nn.one_hot(aa.reshape(-1), 21, dtype=jnp.float32)
    feat = jnp.concatenate([
        onehot,
        mutation_mask.reshape(M, 1).astype(jnp.float32),
        aa.reshape(M, 1).astype(jnp.float32),
        jnp.zeros((M, 1), jnp.float32),
    ], axis=1).astype(jnp.bfloat16)                                     # (M, 24)

    loc, glob = fused_residue_encoder(crd, feat, folded)
    return loc.reshape(N, L, feat_dim), glob.reshape(N, L, feat_dim)


# ----------------------------- pure-JAX reference (for sanity check) -----------------------------
def _reference_forward(params, complex_batch, mutation_mask, args):
    pos14, aa = complex_batch['pos14'], complex_batch['aa']
    feat_dim = args['feat_dim']
    N, L = aa.shape
    mask_atom = jnp.all(complex_batch['pos14_mask'], axis=-1)
    R = construct_3d_basis(pos14[:, :, ATOM_CA], pos14[:, :, ATOM_C], pos14[:, :, ATOM_N])
    t = pos14[:, :, ATOM_CA]
    crd14 = jnp.where(mask_atom[..., None], global_to_local(R, t, pos14), 0.0)
    onehot = jax.nn.one_hot(aa, 21, dtype=jnp.float32)
    crd_feat = (onehot[:, :, :, None, None] * crd14[:, :, None, :, :]).reshape(N, L, 21 * 14 * 3)
    aa_feat = params['aatype_embed'][aa]
    x = jnp.concatenate([crd_feat, aa_feat], axis=-1).reshape(N * L, -1)
    w1, b1, w2, b2, w3, b3, w4, b4 = params['mlp']
    h = jnp.maximum(x @ w1 + b1, 0.0)
    h = jnp.maximum(h @ w2 + b2, 0.0)
    h = jnp.maximum(h @ w3 + b3, 0.0)
    h = h @ w4 + b4
    pe = generate_positional_embedding(feat_dim)
    res = h + jnp.where(mutation_mask.reshape(N * L, 1), pe[1], pe[0])
    coeff = params['coefficient']
    aaf = aa.reshape(-1)
    ipa = res
    mix1 = coeff[0, 0, aaf] * res + coeff[0, 1, aaf] * ipa
    mix2 = coeff[1, 0, aaf] * mix1 + coeff[1, 1, aaf] * ipa
    glob = coeff[2, 0, aaf] * mix2 + coeff[2, 1, aaf] * ipa
    return mix2.reshape(N, L, feat_dim), glob.reshape(N, L, feat_dim)


# ----------------------------- driver -----------------------------
if __name__ == "__main__":
    args = dict(max_relpos=8, rel_dim=8, feat_dim=32, ipa_layer=2, ga_layer=3)
    N, L = 2, 8

    key = jax.random.PRNGKey(0)
    kp, k1, k2, k3, k4 = jax.random.split(key, 5)
    params = init_params(kp, args['feat_dim'], args['rel_dim'], args['max_relpos'])
    folded = fold_params(params, args['feat_dim'])

    pos14 = jax.random.normal(k1, (N, L, 14, 3), jnp.float32)
    aa = jax.random.randint(k2, (N, L), 0, 21)
    seq = jnp.tile(jnp.arange(L, dtype=jnp.int32)[None, :], (N, 1))
    chain = (jnp.arange(L, dtype=jnp.int32)[None, :] >= L // 2).astype(jnp.int32) \
        * jnp.ones((N, 1), jnp.int32)
    pos14_mask = jax.random.bernoulli(k3, 0.9, (N, L, 14, 3))
    pos14_mask = pos14_mask.at[:, :, :5, :].set(True)       # backbone atoms always present
    mutation_mask = jax.random.bernoulli(k4, 0.3, (N, L))

    complex_batch = dict(pos14=pos14, aa=aa, seq=seq, chain_seq=chain, pos14_mask=pos14_mask)

    local_state, global_state = geo_ipa_encoder_forward(
        params, folded, complex_batch, mutation_mask, args)
    jax.block_until_ready((local_state, global_state))

    assert local_state.shape == (N, L, args['feat_dim'])
    assert global_state.shape == (N, L, args['feat_dim'])
    assert bool(jnp.all(jnp.isfinite(local_state))) and bool(jnp.all(jnp.isfinite(global_state)))

    # loose sanity check vs f32 reference (kernel uses bf16 MXU operands)
    ref_loc, ref_glob = _reference_forward(params, complex_batch, mutation_mask, args)
    assert float(jnp.max(jnp.abs(local_state - ref_loc))) < 0.1
    assert float(jnp.max(jnp.abs(global_state - ref_glob))) < 0.1

    print("KERNEL_OK")
</pallas_src>

<mosaic_0001>
module attributes {stable_mosaic.version = 11 : i64} {
  func.func @_fused_kernel(%arg0: i32, %arg1: memref<8x42xbf16, #tpu.memory_space<vmem>>, %arg2: memref<8x24xbf16, #tpu.memory_space<vmem>>, %arg3: memref<42x1024xbf16, #tpu.memory_space<vmem>>, %arg4: memref<1x1024xf32, #tpu.memory_space<vmem>>, %arg5: memref<24x384xf32, #tpu.memory_space<vmem>>, %arg6: memref<1024x128xbf16, #tpu.memory_space<vmem>>, %arg7: memref<128x128xbf16, #tpu.memory_space<vmem>>, %arg8: memref<128x128xbf16, #tpu.memory_space<vmem>>, %arg9: memref<128x128xbf16, #tpu.memory_space<vmem>>, %arg10: memref<4x128xf32, #tpu.memory_space<vmem>>, %arg11: memref<8x128xf32, #tpu.memory_space<vmem>>) attributes {dimension_semantics = [#tpu.dimension_semantics<parallel>], iteration_bounds = array<i64: 2>, scalar_prefetch = 0 : i64, scratch_operands = 0 : i64, tpu.core_type = #tpu.core_type<tc>, window_params = [{transform_indices = @transform_0, window_bounds = array<i64: 8, 42>}, {transform_indices = @transform_1, window_bounds = array<i64: 8, 24>}, {pipeline_mode = #tpu.pipeline_mode<synchronous>, transform_indices = @transform_2, window_bounds = array<i64: 42, 1024>}, {pipeline_mode = #tpu.pipeline_mode<synchronous>, transform_indices = @transform_3, window_bounds = array<i64: 1, 1024>}, {pipeline_mode = #tpu.pipeline_mode<synchronous>, transform_indices = @transform_4, window_bounds = array<i64: 24, 384>}, {pipeline_mode = #tpu.pipeline_mode<synchronous>, transform_indices = @transform_5, window_bounds = array<i64: 1024, 128>}, {pipeline_mode = #tpu.pipeline_mode<synchronous>, transform_indices = @transform_6, window_bounds = array<i64: 128, 128>}, {pipeline_mode = #tpu.pipeline_mode<synchronous>, transform_indices = @transform_7, window_bounds = array<i64: 128, 128>}, {pipeline_mode = #tpu.pipeline_mode<synchronous>, transform_indices = @transform_8, window_bounds = array<i64: 128, 128>}, {pipeline_mode = #tpu.pipeline_mode<synchronous>, transform_indices = @transform_9, window_bounds = array<i64: 4, 128>}, {transform_indices = @transform_10, window_bounds = array<i64: 8, 128>}]} {
    %c0 = arith.constant 0 : index
    %c0_0 = arith.constant 0 : index
    %0 = vector.load %arg1[%c0, %c0_0] : memref<8x42xbf16, #tpu.memory_space<vmem>>, vector<8x42xbf16>
    %c0_1 = arith.constant 0 : index
    %c0_2 = arith.constant 0 : index
    %1 = vector.load %arg2[%c0_1, %c0_2] : memref<8x24xbf16, #tpu.memory_space<vmem>>, vector<8x24xbf16>
    %c0_3 = arith.constant 0 : index
    %c0_4 = arith.constant 0 : index
    %2 = vector.load %arg10[%c0_3, %c0_4] : memref<4x128xf32, #tpu.memory_space<vmem>>, vector<4x128xf32>
    %3 = arith.extf %1 : vector<8x24xbf16> to vector<8x24xf32>
    %c0_5 = arith.constant 0 : index
    %c0_6 = arith.constant 0 : index
    %4 = vector.load %arg5[%c0_5, %c0_6] : memref<24x384xf32, #tpu.memory_space<vmem>>, vector<24x384xf32>
    %cst = arith.constant dense<0.000000e+00> : vector<8x384xf32>
    %5 = tpu.matmul %3, %4, %cst {dimension_numbers = #tpu.dot_dimension_numbers<[1], [0], [0], [1], [0, 0, 1, 1], [], []>} : vector<8x24xf32>, vector<24x384xf32>, vector<8x384xf32> -> vector<8x384xf32>
    %c0_7 = arith.constant 0 : index
    %c0_8 = arith.constant 0 : index
    %6 = vector.load %arg3[%c0_7, %c0_8] : memref<42x1024xbf16, #tpu.memory_space<vmem>>, vector<42x1024xbf16>
    %cst_9 = arith.constant dense<0.000000e+00> : vector<8x1024xf32>
    %7 = tpu.matmul %0, %6, %cst_9 {dimension_numbers = #tpu.dot_dimension_numbers<[1], [0], [0], [1], [0, 0, 1, 1], [], []>} : vector<8x42xbf16>, vector<42x1024xbf16>, vector<8x1024xf32> -> vector<8x1024xf32>
    %8 = vector.extract_strided_slice %1 {offsets = [0, 22], sizes = [8, 1], strides = [1, 1]} : vector<8x24xbf16> to vector<8x1xbf16>
    %9 = arith.extf %8 : vector<8x1xbf16> to vector<8x1xf32>
    %c0_10 = arith.constant 0 : index
    %c0_11 = arith.constant 0 : index
    %10 = vector.load %arg4[%c0_10, %c0_11] : memref<1x1024xf32, #tpu.memory_space<vmem>>, vector<1x1024xf32>
    %11 = vector.broadcast %9 : vector<8x1xf32> to vector<8x1024xf32>
    %12 = vector.broadcast %10 : vector<1x1024xf32> to vector<8x1024xf32>
    %13 = arith.cmpf oeq, %11, %12 : vector<8x1024xf32>
    %cst_12 = arith.constant 0.000000e+00 : f32
    %14 = vector.broadcast %cst_12 : f32 to vector<8x1024xf32>
    %15 = arith.select %13, %7, %14 : vector<8x1024xi1>, vector<8x1024xf32>
    %16 = arith.truncf %15 : vector<8x1024xf32> to vector<8x1024xbf16>
    %c0_13 = arith.constant 0 : index
    %c0_14 = arith.constant 0 : index
    %17 = vector.load %arg6[%c0_13, %c0_14] : memref<1024x128xbf16, #tpu.memory_space<vmem>>, vector<1024x128xbf16>
    %cst_15 = arith.constant dense<0.000000e+00> : vector<8x128xf32>
    %18 = tpu.matmul %16, %17, %cst_15 {dimension_numbers = #tpu.dot_dimension_numbers<[1], [0], [0], [1], [0, 0, 1, 1], [], []>} : vector<8x1024xbf16>, vector<1024x128xbf16>, vector<8x128xf32> -> vector<8x128xf32>
    %19 = vector.extract_strided_slice %5 {offsets = [0, 0], sizes = [8, 128], strides = [1, 1]} : vector<8x384xf32> to vector<8x128xf32>
    %20 = arith.addf %18, %19 : vector<8x128xf32>
    %21 = vector.extract_strided_slice %2 {offsets = [0, 0], sizes = [1, 128], strides = [1, 1]} : vector<4x128xf32> to vector<1x128xf32>
    %22 = vector.broadcast %21 : vector<1x128xf32> to vector<8x128xf32>
    %23 = arith.addf %20, %22 : vector<8x128xf32>
    %cst_16 = arith.constant 0.000000e+00 : f32
    %24 = vector.broadcast %cst_16 : f32 to vector<8x128xf32>
    %25 = arith.maximumf %23, %24 : vector<8x128xf32>
    %26 = arith.truncf %25 : vector<8x128xf32> to vector<8x128xbf16>
    %c0_17 = arith.constant 0 : index
    %c0_18 = arith.constant 0 : index
    %27 = vector.load %arg7[%c0_17, %c0_18] : memref<128x128xbf16, #tpu.memory_space<vmem>>, vector<128x128xbf16>
    %cst_19 = arith.constant dense<0.000000e+00> : vector<8x128xf32>
    %28 = tpu.matmul %26, %27, %cst_19 {dimension_numbers = #tpu.dot_dimension_numbers<[1], [0], [0], [1], [0, 0, 1, 1], [], []>} : vector<8x128xbf16>, vector<128x128xbf16>, vector<8x128xf32> -> vector<8x128xf32>
    %29 = vector.extract_strided_slice %2 {offsets = [1, 0], sizes = [1, 128], strides = [1, 1]} : vector<4x128xf32> to vector<1x128xf32>
    %30 = vector.broadcast %29 : vector<1x128xf32> to vector<8x128xf32>
    %31 = arith.addf %28, %30 : vector<8x128xf32>
    %cst_20 = arith.constant 0.000000e+00 : f32
    %32 = vector.broadcast %cst_20 : f32 to vector<8x128xf32>
    %33 = arith.maximumf %31, %32 : vector<8x128xf32>
    %34 = arith.truncf %33 : vector<8x128xf32> to vector<8x128xbf16>
    %c0_21 = arith.constant 0 : index
    %c0_22 = arith.constant 0 : index
    %35 = vector.load %arg8[%c0_21, %c0_22] : memref<128x128xbf16, #tpu.memory_space<vmem>>, vector<128x128xbf16>
    %cst_23 = arith.constant dense<0.000000e+00> : vector<8x128xf32>
    %36 = tpu.matmul %34, %35, %cst_23 {dimension_numbers = #tpu.dot_dimension_numbers<[1], [0], [0], [1], [0, 0, 1, 1], [], []>} : vector<8x128xbf16>, vector<128x128xbf16>, vector<8x128xf32> -> vector<8x128xf32>
    %37 = vector.extract_strided_slice %2 {offsets = [2, 0], sizes = [1, 128], strides = [1, 1]} : vector<4x128xf32> to vector<1x128xf32>
    %38 = vector.broadcast %37 : vector<1x128xf32> to vector<8x128xf32>
    %39 = arith.addf %36, %38 : vector<8x128xf32>
    %cst_24 = arith.constant 0.000000e+00 : f32
    %40 = vector.broadcast %cst_24 : f32 to vector<8x128xf32>
    %41 = arith.maximumf %39, %40 : vector<8x128xf32>
    %42 = arith.truncf %41 : vector<8x128xf32> to vector<8x128xbf16>
    %c0_25 = arith.constant 0 : index
    %c0_26 = arith.constant 0 : index
    %43 = vector.load %arg9[%c0_25, %c0_26] : memref<128x128xbf16, #tpu.memory_space<vmem>>, vector<128x128xbf16>
    %cst_27 = arith.constant dense<0.000000e+00> : vector<8x128xf32>
    %44 = tpu.matmul %42, %43, %cst_27 {dimension_numbers = #tpu.dot_dimension_numbers<[1], [0], [0], [1], [0, 0, 1, 1], [], []>} : vector<8x128xbf16>, vector<128x128xbf16>, vector<8x128xf32> -> vector<8x128xf32>
    %45 = vector.extract_strided_slice %2 {offsets = [3, 0], sizes = [1, 128], strides = [1, 1]} : vector<4x128xf32> to vector<1x128xf32>
    %46 = vector.broadcast %45 : vector<1x128xf32> to vector<8x128xf32>
    %47 = arith.addf %44, %46 : vector<8x128xf32>
    %48 = vector.extract_strided_slice %47 {offsets = [0, 0], sizes = [8, 32], strides = [1, 1]} : vector<8x128xf32> to vector<8x32xf32>
    %49 = vector.extract_strided_slice %5 {offsets = [0, 128], sizes = [8, 32], strides = [1, 1]} : vector<8x384xf32> to vector<8x32xf32>
    %50 = arith.addf %48, %49 : vector<8x32xf32>
    %51 = vector.extract_strided_slice %5 {offsets = [0, 160], sizes = [8, 32], strides = [1, 1]} : vector<8x384xf32> to vector<8x32xf32>
    %52 = vector.extract_strided_slice %5 {offsets = [0, 192], sizes = [8, 32], strides = [1, 1]} : vector<8x384xf32> to vector<8x32xf32>
    %53 = vector.extract_strided_slice %5 {offsets = [0, 224], sizes = [8, 32], strides = [1, 1]} : vector<8x384xf32> to vector<8x32xf32>
    %54 = vector.extract_strided_slice %5 {offsets = [0, 256], sizes = [8, 32], strides = [1, 1]} : vector<8x384xf32> to vector<8x32xf32>
    %55 = vector.extract_strided_slice %5 {offsets = [0, 288], sizes = [8, 32], strides = [1, 1]} : vector<8x384xf32> to vector<8x32xf32>
    %56 = vector.extract_strided_slice %5 {offsets = [0, 320], sizes = [8, 32], strides = [1, 1]} : vector<8x384xf32> to vector<8x32xf32>
    %57 = arith.mulf %51, %50 : vector<8x32xf32>
    %58 = arith.mulf %52, %50 : vector<8x32xf32>
    %59 = arith.addf %57, %58 : vector<8x32xf32>
    %60 = arith.mulf %53, %59 : vector<8x32xf32>
    %61 = arith.mulf %54, %50 : vector<8x32xf32>
    %62 = arith.addf %60, %61 : vector<8x32xf32>
    %63 = arith.mulf %55, %62 : vector<8x32xf32>
    %64 = arith.mulf %56, %50 : vector<8x32xf32>
    %65 = arith.addf %63, %64 : vector<8x32xf32>
    %c0_28 = arith.constant 0 : index
    %c0_29 = arith.constant 0 : index
    %66 = vector.load %arg11[%c0_28, %c0_29] : memref<8x128xf32, #tpu.memory_space<vmem>>, vector<8x32xf32>
    tpu.vector_store %arg11[%c0_28, %c0_29], %62 {strides = array<i32>} : memref<8x128xf32, #tpu.memory_space<vmem>>, vector<8x32xf32>,
    %c0_30 = arith.constant 0 : index
    %c32 = arith.constant 32 : index
    %67 = vector.load %arg11[%c0_30, %c32] : memref<8x128xf32, #tpu.memory_space<vmem>>, vector<8x32xf32>
    tpu.vector_store %arg11[%c0_30, %c32], %65 {strides = array<i32>} : memref<8x128xf32, #tpu.memory_space<vmem>>, vector<8x32xf32>,
    %cst_31 = arith.constant 0.000000e+00 : f32
    %68 = vector.broadcast %cst_31 : f32 to vector<8x64xf32>
    %c0_32 = arith.constant 0 : index
    %c64 = arith.constant 64 : index
    %69 = vector.load %arg11[%c0_32, %c64] : memref<8x128xf32, #tpu.memory_space<vmem>>, vector<8x64xf32>
    tpu.vector_store %arg11[%c0_32, %c64], %68 {strides = array<i32>} : memref<8x128xf32, #tpu.memory_space<vmem>>, vector<8x64xf32>,
    return
  }
  func.func @transform_0(%arg0: i32) -> (i32, i32) {
    %c0_i32 = arith.constant 0 : i32
    %c0_i32_0 = arith.constant 0 : i32
    return %arg0, %c0_i32 : i32, i32
  }
  func.func @transform_1(%arg0: i32) -> (i32, i32) {
    %c0_i32 = arith.constant 0 : i32
    %c0_i32_0 = arith.constant 0 : i32
    return %arg0, %c0_i32 : i32, i32
  }
  func.func @transform_2(%arg0: i32) -> (i32, i32) {
    %c0_i32 = arith.constant 0 : i32
    %c0_i32_0 = arith.constant 0 : i32
    %c0_i32_1 = arith.constant 0 : i32
    return %c0_i32, %c0_i32_0 : i32, i32
  }
  func.func @transform_3(%arg0: i32) -> (i32, i32) {
    %c0_i32 = arith.constant 0 : i32
    %c0_i32_0 = arith.constant 0 : i32
    %c0_i32_1 = arith.constant 0 : i32
    return %c0_i32, %c0_i32_0 : i32, i32
  }
  func.func @transform_4(%arg0: i32) -> (i32, i32) {
    %c0_i32 = arith.constant 0 : i32
    %c0_i32_0 = arith.constant 0 : i32
    %c0_i32_1 = arith.constant 0 : i32
    return %c0_i32, %c0_i32_0 : i32, i32
  }
  func.func @transform_5(%arg0: i32) -> (i32, i32) {
    %c0_i32 = arith.constant 0 : i32
    %c0_i32_0 = arith.constant 0 : i32
    %c0_i32_1 = arith.constant 0 : i32
    return %c0_i32, %c0_i32_0 : i32, i32
  }
  func.func @transform_6(%arg0: i32) -> (i32, i32) {
    %c0_i32 = arith.constant 0 : i32
    %c0_i32_0 = arith.constant 0 : i32
    %c0_i32_1 = arith.constant 0 : i32
    return %c0_i32, %c0_i32_0 : i32, i32
  }
  func.func @transform_7(%arg0: i32) -> (i32, i32) {
    %c0_i32 = arith.constant 0 : i32
    %c0_i32_0 = arith.constant 0 : i32
    %c0_i32_1 = arith.constant 0 : i32
    return %c0_i32, %c0_i32_0 : i32, i32
  }
  func.func @transform_8(%arg0: i32) -> (i32, i32) {
    %c0_i32 = arith.constant 0 : i32
    %c0_i32_0 = arith.constant 0 : i32
    %c0_i32_1 = arith.constant 0 : i32
    return %c0_i32, %c0_i32_0 : i32, i32
  }
  func.func @transform_9(%arg0: i32) -> (i32, i32) {
    %c0_i32 = arith.constant 0 : i32
    %c0_i32_0 = arith.constant 0 : i32
    %c0_i32_1 = arith.constant 0 : i32
    return %c0_i32, %c0_i32_0 : i32, i32
  }
  func.func @transform_10(%arg0: i32) -> (i32, i32) {
    %c0_i32 = arith.constant 0 : i32
    %c0_i32_0 = arith.constant 0 : i32
    return %arg0, %c0_i32 : i32, i32
  }
}

</mosaic_0001>

<llo_original>
// kernel: tpu_custom_call.1
$region0: #{tpu_custom_call.1}
  #allocation0 [shape = 'u32[]', space=smem, size = 0x4, offset = 0x4, fixed_abs, tag = 'smem constant byte address 0x4 - core index']
  #allocation1 [shape = 'u32[144,128]{1,0:T(1,128)}', space=vmem, size = 0x12000, scoped, tag = 'internal scratch']
  %s0 = inlined_call_operand.hbm [shape: bf16[16,42], index: 0, kind: input, shape index: {}]
  %s1 = inlined_call_operand.hbm [shape: bf16[16,24], index: 1, kind: input, shape index: {}]
  %s2 = inlined_call_operand.hbm [shape: bf16[42,1024], index: 2, kind: input, shape index: {}]
  %s3 = inlined_call_operand.vmem [shape: f32[1,1024], index: 3, kind: input, shape index: {}]
  %s4 = inlined_call_operand.hbm [shape: f32[24,384], index: 4, kind: input, shape index: {}]
  %s5 = inlined_call_operand.hbm [shape: bf16[1024,128], index: 5, kind: input, shape index: {}]
  %s6 = inlined_call_operand.hbm [shape: bf16[128,128], index: 6, kind: input, shape index: {}]
  %s7 = inlined_call_operand.hbm [shape: bf16[128,128], index: 7, kind: input, shape index: {}]
  %s8 = inlined_call_operand.hbm [shape: bf16[128,128], index: 8, kind: input, shape index: {}]
  %s9 = inlined_call_operand.vmem [shape: f32[4,128], index: 9, kind: input, shape index: {}]
  %s10 = inlined_call_operand.hbm [shape: f32[16,128], index: 10, kind: output, shape index: {}]
  %s11 = sld [smem:[#allocation0]]
  $region105: #{tpu_custom_call.1} parent=0
    _
  %s13 = ssub.s32 1, %s11
  %s14 = scalar_select 0, %s13, %s11
  $region1: #{tpu_custom_call.1} parent=0
    #allocation2 [shape = 'u8[4096]{0}', space=vmem, size = 0x1000, scoped, tag = 'input window, operand 0']
    #allocation3 [shape = 's32[2]{0}', space=sflag, size = 0x8, scoped, tag = 'scoped memory for tpu_custom_call.1']
    #allocation4 [shape = 's32[2]{0}', space=sflag, size = 0x8, scoped, tag = 'scoped memory for tpu_custom_call.1']
    #allocation5 [shape = 'u8[4096]{0}', space=vmem, size = 0x1000, scoped, tag = 'input window, operand 1']
    #allocation6 [shape = 's32[2]{0}', space=sflag, size = 0x8, scoped, tag = 'scoped memory for tpu_custom_call.1']
    #allocation7 [shape = 'u8[98304]{0}', space=vmem, size = 0x18000, scoped, tag = 'input window, operand 2, single buffered']
    #allocation8 [shape = 'u8[36864]{0}', space=vmem, size = 0x9000, scoped, tag = 'input window, operand 4, single buffered']
    #allocation9 [shape = 's32[1]{0}', space=sflag, size = 0x4, scoped, tag = 'scoped memory for tpu_custom_call.1']
    #allocation10 [shape = 'u8[262144]{0}', space=vmem, size = 0x40000, scoped, tag = 'input window, operand 5, single buffered']
    #allocation11 [shape = 'u8[32768]{0}', space=vmem, size = 0x8000, scoped, tag = 'input window, operand 6, single buffered']
    #allocation12 [shape = 's32[1]{0}', space=sflag, size = 0x4, scoped, tag = 'scoped memory for tpu_custom_call.1']
    #allocation13 [shape = 'u8[32768]{0}', space=vmem, size = 0x8000, scoped, tag = 'input window, operand 7, single buffered']
    #allocation14 [shape = 'u8[32768]{0}', space=vmem, size = 0x8000, scoped, tag = 'input window, operand 8, single buffered']
    #allocation15 [shape = 's32[1]{0}', space=sflag, size = 0x4, scoped, tag = 'scoped memory for tpu_custom_call.1']
    #allocation16 [shape = 'u8[8192]{0}', space=vmem, size = 0x2000, scoped, tag = 'output window, operand 0']
    %15 = vsyncpa [#allocation3], 0
    %s16 = scalar_lea.sflag [#allocation3], 1
    %17 = vsyncpa %s16, 0
    %18 = vsyncpa [#allocation6], 0
    %s19 = scalar_lea.sflag [#allocation6], 1
    %20 = vsyncpa %s19, 0
    %21 = vsyncpa [#allocation9], 0
    %22 = vsyncpa [#allocation12], 0
    %23 = vsyncpa [#allocation15], 0
    %24 = vsyncpa [#allocation4], 0
    %s25 = scalar_lea.sflag [#allocation4], 1
    %26 = vsyncpa %s25, 0
    loop: start=0, step=1, limit=4
    $region2: #{tpu_custom_call.1} parent=1 // loop_pre_header
      _
    $region3: #{tpu_custom_call.1} parent=1 // loop_header
      %s28 = sphi 0, %s32
      %p29 = scmp.ge.s32.totalorder %s28, 4
      %s38 = sphi 0, %s40
      %s41 = sphi 0, %s38
      %s42 = sphi 0, %s41
      %s58 = sphi 0, %s42
      %s64 = sphi 0, %s66
      %s67 = sphi 0, %s64
      %s68 = sphi 0, %s67
      %s84 = sphi 0, %s68
      %s88 = sphi 0, %s88
      %s90 = sphi 0, %s88
      %s91 = sphi 0, %s90
      %s105 = sphi 0, %s91
      %s109 = sphi 0, %s109
      %s111 = sphi 0, %s109
      %s112 = sphi 0, %s111
      %s126 = sphi 0, %s112
      %s130 = sphi 0, %s130
      %s132 = sphi 0, %s130
      %s133 = sphi 0, %s132
      %s147 = sphi 0, %s133
      %s151 = sphi 0, %s151
      %s153 = sphi 0, %s151
      %s154 = sphi 0, %s153
      %s168 = sphi 0, %s154
      %s172 = sphi 0, %s172
      %s174 = sphi 0, %s172
      %s175 = sphi 0, %s174
      %s189 = sphi 0, %s175
      %s193 = sphi 0, %s193
      %s195 = sphi 0, %s193
      %s196 = sphi 0, %s195
      %s210 = sphi 0, %s196
      %s214 = sphi 0, %s214
      %s216 = sphi 0, %s214
      %s217 = sphi 0, %s216
      %s231 = sphi 0, %s217
      %s235 = sphi 0, %s235
      %s237 = sphi 0, %s235
      %s238 = sphi 0, %s237
      %s252 = sphi 0, %s238
      %s258 = sphi 0, %s260
      %s261 = sphi 0, %s258
      %s262 = sphi 0, %s261
      %s278 = sphi 0, %s262
    $region4: #{tpu_custom_call.1} parent=1 // loop_header_branch
      %31 = sbr.rel (%p29) target = $region8
    $region5: #{tpu_custom_call.1} parent=1 // loop_body
      %s33 = ssub.s32 %s28, 1
      %s34 = ssub.s32 %s28, 2
      %s35 = sadd.s32 %s28, 1
      %s36 = ssub.s32 %s28, %s35
      %p37 = scmp.eq.s32.totalorder %s36, 0
      %s39 = sadd.s32 %s38, 1
      %s40 = scalar_select %p37, %s38, %s39
      %p43 = pneg %p37
      %p44 = scmp.eq.s32.totalorder %s28, 1
      %p45 = por %p43, %p44
      %p46 = scmp.ne.s32.totalorder %s38, %s41
      %p47 = scmp.eq.s32.totalorder %s28, 0
      %p48 = por %p46, %p47
      %p49 = scmp.ne.s32.totalorder %s38, %s41
      %p50 = scmp.eq.s32.totalorder %s33, 1
      %p51 = por %p49, %p50
      %p52 = scmp.ne.s32.totalorder %s41, %s42
      %p53 = scmp.eq.s32.totalorder %s33, 0
      %p54 = por %p52, %p53
      %p55 = scmp.ne.s32.totalorder %s41, %s42
      %p56 = scmp.eq.s32.totalorder %s34, 1
      %p57 = por %p55, %p56
      %p59 = scmp.ne.s32.totalorder %s42, %s58
      %p60 = scmp.eq.s32.totalorder %s34, 0
      %p61 = por %p59, %p60
      %s62 = ssub.s32 %s28, %s35
      %p63 = scmp.eq.s32.totalorder %s62, 0
      %s65 = sadd.s32 %s64, 1
      %s66 = scalar_select %p63, %s64, %s65
      %p69 = pneg %p63
      %p70 = scmp.eq.s32.totalorder %s28, 1
      %p71 = por %p69, %p70
      %p72 = scmp.ne.s32.totalorder %s64, %s67
      %p73 = scmp.eq.s32.totalorder %s28, 0
      %p74 = por %p72, %p73
      %p75 = scmp.ne.s32.totalorder %s64, %s67
      %p76 = scmp.eq.s32.totalorder %s33, 1
      %p77 = por %p75, %p76
      %p78 = scmp.ne.s32.totalorder %s67, %s68
      %p79 = scmp.eq.s32.totalorder %s33, 0
      %p80 = por %p78, %p79
      %p81 = scmp.ne.s32.totalorder %s67, %s68
      %p82 = scmp.eq.s32.totalorder %s34, 1
      %p83 = por %p81, %p82
      %p85 = scmp.ne.s32.totalorder %s68, %s84
      %p86 = scmp.eq.s32.totalorder %s34, 0
      %p87 = por %p85, %p86
      %s89 = sadd.s32 %s88, 1
      %p92 = scmp.eq.s32.totalorder %s28, 1
      %p93 = scmp.ne.s32.totalorder %s88, %s90
      %p94 = scmp.eq.s32.totalorder %s28, 0
      %p95 = por %p93, %p94
      %p96 = scmp.ne.s32.totalorder %s88, %s90
      %p97 = scmp.eq.s32.totalorder %s33, 1
      %p98 = por %p96, %p97
      %p99 = scmp.ne.s32.totalorder %s90, %s91
      %p100 = scmp.eq.s32.totalorder %s33, 0
      %p101 = por %p99, %p100
      %p102 = scmp.ne.s32.totalorder %s90, %s91
      %p103 = scmp.eq.s32.totalorder %s34, 1
      %p104 = por %p102, %p103
      %p106 = scmp.ne.s32.totalorder %s91, %s105
      %p107 = scmp.eq.s32.totalorder %s34, 0
      %p108 = por %p106, %p107
      %s110 = sadd.s32 %s109, 1
      %p113 = scmp.eq.s32.totalorder %s28, 1
      %p114 = scmp.ne.s32.totalorder %s109, %s111
      %p115 = scmp.eq.s32.totalorder %s28, 0
      %p116 = por %p114, %p115
      %p117 = scmp.ne.s32.totalorder %s109, %s111
      %p118 = scmp.eq.s32.totalorder %s33, 1
      %p119 = por %p117, %p118
      %p120 = scmp.ne.s32.totalorder %s111, %s112
      %p121 = scmp.eq.s32.totalorder %s33, 0
      %p122 = por %p120, %p121
      %p123 = scmp.ne.s32.totalorder %s111, %s112
      %p124 = scmp.eq.s32.totalorder %s34, 1
      %p125 = por %p123, %p124
      %p127 = scmp.ne.s32.totalorder %s112, %s126
      %p128 = scmp.eq.s32.totalorder %s34, 0
      %p129 = por %p127, %p128
      %s131 = sadd.s32 %s130, 1
      %p134 = scmp.eq.s32.totalorder %s28, 1
      %p135 = scmp.ne.s32.totalorder %s130, %s132
      %p136 = scmp.eq.s32.totalorder %s28, 0
      %p137 = por %p135, %p136
      %p138 = scmp.ne.s32.totalorder %s130, %s132
      %p139 = scmp.eq.s32.totalorder %s33, 1
      %p140 = por %p138, %p139
      %p141 = scmp.ne.s32.totalorder %s132, %s133
      %p142 = scmp.eq.s32.totalorder %s33, 0
      %p143 = por %p141, %p142
      %p144 = scmp.ne.s32.totalorder %s132, %s133
      %p145 = scmp.eq.s32.totalorder %s34, 1
      %p146 = por %p144, %p145
      %p148 = scmp.ne.s32.totalorder %s133, %s147
      %p149 = scmp.eq.s32.totalorder %s34, 0
      %p150 = por %p148, %p149
      %s152 = sadd.s32 %s151, 1
      %p155 = scmp.eq.s32.totalorder %s28, 1
      %p156 = scmp.ne.s32.totalorder %s151, %s153
      %p157 = scmp.eq.s32.totalorder %s28, 0
      %p158 = por %p156, %p157
      %p159 = scmp.ne.s32.totalorder %s151, %s153
      %p160 = scmp.eq.s32.totalorder %s33, 1
      %p161 = por %p159, %p160
      %p162 = scmp.ne.s32.totalorder %s153, %s154
      %p163 = scmp.eq.s32.totalorder %s33, 0
      %p164 = por %p162, %p163
      %p165 = scmp.ne.s32.totalorder %s153, %s154
      %p166 = scmp.eq.s32.totalorder %s34, 1
      %p167 = por %p165, %p166
      %p169 = scmp.ne.s32.totalorder %s154, %s168
      %p170 = scmp.eq.s32.totalorder %s34, 0
      %p171 = por %p169, %p170
      %s173 = sadd.s32 %s172, 1
      %p176 = scmp.eq.s32.totalorder %s28, 1
      %p177 = scmp.ne.s32.totalorder %s172, %s174
      %p178 = scmp.eq.s32.totalorder %s28, 0
      %p179 = por %p177, %p178
      %p180 = scmp.ne.s32.totalorder %s172, %s174
      %p181 = scmp.eq.s32.totalorder %s33, 1
      %p182 = por %p180, %p181
      %p183 = scmp.ne.s32.totalorder %s174, %s175
      %p184 = scmp.eq.s32.totalorder %s33, 0
      %p185 = por %p183, %p184
      %p186 = scmp.ne.s32.totalorder %s174, %s175
      %p187 = scmp.eq.s32.totalorder %s34, 1
      %p188 = por %p186, %p187
      %p190 = scmp.ne.s32.totalorder %s175, %s189
      %p191 = scmp.eq.s32.totalorder %s34, 0
      %p192 = por %p190, %p191
      %s194 = sadd.s32 %s193, 1
      %p197 = scmp.eq.s32.totalorder %s28, 1
      %p198 = scmp.ne.s32.totalorder %s193, %s195
      %p199 = scmp.eq.s32.totalorder %s28, 0
      %p200 = por %p198, %p199
      %p201 = scmp.ne.s32.totalorder %s193, %s195
      %p202 = scmp.eq.s32.totalorder %s33, 1
      %p203 = por %p201, %p202
      %p204 = scmp.ne.s32.totalorder %s195, %s196
      %p205 = scmp.eq.s32.totalorder %s33, 0
      %p206 = por %p204, %p205
      %p207 = scmp.ne.s32.totalorder %s195, %s196
      %p208 = scmp.eq.s32.totalorder %s34, 1
      %p209 = por %p207, %p208
      %p211 = scmp.ne.s32.totalorder %s196, %s210
      %p212 = scmp.eq.s32.totalorder %s34, 0
      %p213 = por %p211, %p212
      %s215 = sadd.s32 %s214, 1
      %p218 = scmp.eq.s32.totalorder %s28, 1
      %p219 = scmp.ne.s32.totalorder %s214, %s216
      %p220 = scmp.eq.s32.totalorder %s28, 0
      %p221 = por %p219, %p220
      %p222 = scmp.ne.s32.totalorder %s214, %s216
      %p223 = scmp.eq.s32.totalorder %s33, 1
      %p224 = por %p222, %p223
      %p225 = scmp.ne.s32.totalorder %s216, %s217
      %p226 = scmp.eq.s32.totalorder %s33, 0
      %p227 = por %p225, %p226
      %p228 = scmp.ne.s32.totalorder %s216, %s217
      %p229 = scmp.eq.s32.totalorder %s34, 1
      %p230 = por %p228, %p229
      %p232 = scmp.ne.s32.totalorder %s217, %s231
      %p233 = scmp.eq.s32.totalorder %s34, 0
      %p234 = por %p232, %p233
      %s236 = sadd.s32 %s235, 1
      %p239 = scmp.eq.s32.totalorder %s28, 1
      %p240 = scmp.ne.s32.totalorder %s235, %s237
      %p241 = scmp.eq.s32.totalorder %s28, 0
      %p242 = por %p240, %p241
      %p243 = scmp.ne.s32.totalorder %s235, %s237
      %p244 = scmp.eq.s32.totalorder %s33, 1
      %p245 = por %p243, %p244
      %p246 = scmp.ne.s32.totalorder %s237, %s238
      %p247 = scmp.eq.s32.totalorder %s33, 0
      %p248 = por %p246, %p247
      %p249 = scmp.ne.s32.totalorder %s237, %s238
      %p250 = scmp.eq.s32.totalorder %s34, 1
      %p251 = por %p249, %p250
      %p253 = scmp.ne.s32.totalorder %s238, %s252
      %p254 = scmp.eq.s32.totalorder %s34, 0
      %p255 = por %p253, %p254
      %s256 = ssub.s32 %s28, %s35
      %p257 = scmp.eq.s32.totalorder %s256, 0
      %s259 = sadd.s32 %s258, 1
      %s260 = scalar_select %p257, %s258, %s259
      %p263 = pneg %p257
      %p264 = scmp.eq.s32.totalorder %s28, 1
      %p265 = por %p263, %p264
      %p266 = scmp.ne.s32.totalorder %s258, %s261
      %p267 = scmp.eq.s32.totalorder %s28, 0
      %p268 = por %p266, %p267
      %p269 = scmp.ne.s32.totalorder %s258, %s261
      %p270 = scmp.eq.s32.totalorder %s33, 1
      %p271 = por %p269, %p270
      %p272 = scmp.ne.s32.totalorder %s261, %s262
      %p273 = scmp.eq.s32.totalorder %s33, 0
      %p274 = por %p272, %p273
      %p275 = scmp.ne.s32.totalorder %s261, %s262
      %p276 = scmp.eq.s32.totalorder %s34, 1
      %p277 = por %p275, %p276
      %p279 = scmp.ne.s32.totalorder %s262, %s278
      %p280 = scmp.eq.s32.totalorder %s34, 0
      %p281 = por %p279, %p280
      %p282 = scmp.le.s32.totalorder 1, %s28
      %p283 = scmp.lt.s32.totalorder %s28, 3
      %p284 = pnand %p282, %p283
      %p285 = pneg %p284
      // Predicated region
      $region9: #{tpu_custom_call.1} parent=5 // pred_check
        _
      $region10: #{tpu_custom_call.1} parent=5 // pred_check_branch
        %287 = sbr.rel (%p284) target = $region12
      $region11: #{tpu_custom_call.1} parent=5 // pred_region
        %s288 = ssub.s32 %s28, 1
        // Predicated region
        $region13: #{tpu_custom_call.1} parent=11 // pred_check
          %p289 = pneg %p101
        $region14: #{tpu_custom_call.1} parent=11 // pred_check_branch
          %291 = sbr.rel (%p289) target = $region16
        $region15: #{tpu_custom_call.1} parent=11 // pred_region
          %s293 = ssub.s32 3072, 3072
          %294 = vsyncadd [#allocation6], %s293
          %s295 = sshll.u32 [#allocation7], 4
          %s296 = int_to_ptr.vmem [resolvable:$true] %s295
          %301 = dma.hbm_to_vmem [thread:$0]  %s2, 3072, %s296, [#allocation6], 512, 512, 32
        $region16: #{tpu_custom_call.1} parent=11 // pred_fallthru
          _
        // Predicated region
        $region17: #{tpu_custom_call.1} parent=11 // pred_check
          %p302 = pneg %p122
        $region18: #{tpu_custom_call.1} parent=11 // pred_check_branch
          %304 = sbr.rel (%p302) target = $region20
        $region19: #{tpu_custom_call.1} parent=11 // pred_region
          _
        $region20: #{tpu_custom_call.1} parent=11 // pred_fallthru
          _
        // Predicated region
        $region21: #{tpu_custom_call.1} parent=11 // pred_check
          %p305 = pneg %p143
        $region22: #{tpu_custom_call.1} parent=11 // pred_check_branch
          %307 = sbr.rel (%p305) target = $region24
        $region23: #{tpu_custom_call.1} parent=11 // pred_region
          %s309 = ssub.s32 1152, 1152
          %310 = vsyncadd [#allocation9], %s309
          %s311 = sshll.u32 [#allocation8], 4
          %s312 = int_to_ptr.vmem [resolvable:$true] %s311
          %317 = dma.hbm_to_vmem [thread:$0]  %s4, 1152, %s312, [#allocation9], 384, 384, 24
        $region24: #{tpu_custom_call.1} parent=11 // pred_fallthru
          _
        // Predicated region
        $region25: #{tpu_custom_call.1} parent=11 // pred_check
          %p318 = pneg %p164
        $region26: #{tpu_custom_call.1} parent=11 // pred_check_branch
          %320 = sbr.rel (%p318) target = $region28
        $region27: #{tpu_custom_call.1} parent=11 // pred_region
          %s322 = ssub.s32 8192, 8192
          %323 = vsyncadd [#allocation9], %s322
          %s324 = sshll.u32 [#allocation10], 4
          %s325 = int_to_ptr.vmem [resolvable:$true] %s324
          %330 = dma.hbm_to_vmem [thread:$0]  %s5, 8192, %s325, [#allocation9], 64, 64, 4
        $region28: #{tpu_custom_call.1} parent=11 // pred_fallthru
          _
        // Predicated region
        $region29: #{tpu_custom_call.1} parent=11 // pred_check
          %p331 = pneg %p185
        $region30: #{tpu_custom_call.1} parent=11 // pred_check_branch
          %333 = sbr.rel (%p331) target = $region32
        $region31: #{tpu_custom_call.1} parent=11 // pred_region
          %s335 = ssub.s32 1024, 1024
          %336 = vsyncadd [#allocation12], %s335
          %s337 = sshll.u32 [#allocation11], 4
          %s338 = int_to_ptr.vmem [resolvable:$true] %s337
          %343 = dma.hbm_to_vmem [thread:$0]  %s6, 1024, %s338, [#allocation12], 64, 64, 4
        $region32: #{tpu_custom_call.1} parent=11 // pred_fallthru
          _
        // Predicated region
        $region33: #{tpu_custom_call.1} parent=11 // pred_check
          %p344 = pneg %p206
        $region34: #{tpu_custom_call.1} parent=11 // pred_check_branch
          %346 = sbr.rel (%p344) target = $region36
        $region35: #{tpu_custom_call.1} parent=11 // pred_region
          %s348 = ssub.s32 1024, 1024
          %349 = vsyncadd [#allocation12], %s348
          %s350 = sshll.u32 [#allocation13], 4
          %s351 = int_to_ptr.vmem [resolvable:$true] %s350
          %356 = dma.hbm_to_vmem [thread:$0]  %s7, 1024, %s351, [#allocation12], 64, 64, 4
        $region36: #{tpu_custom_call.1} parent=11 // pred_fallthru
          _
        // Predicated region
        $region37: #{tpu_custom_call.1} parent=11 // pred_check
          %p357 = pneg %p227
        $region38: #{tpu_custom_call.1} parent=11 // pred_check_branch
          %359 = sbr.rel (%p357) target = $region40
        $region39: #{tpu_custom_call.1} parent=11 // pred_region
          %s361 = ssub.s32 1024, 1024
          %362 = vsyncadd [#allocation15], %s361
          %s363 = sshll.u32 [#allocation14], 4
          %s364 = int_to_ptr.vmem [resolvable:$true] %s363
          %369 = dma.hbm_to_vmem [thread:$0]  %s8, 1024, %s364, [#allocation15], 64, 64, 4
        $region40: #{tpu_custom_call.1} parent=11 // pred_fallthru
          _
        // Predicated region
        $region41: #{tpu_custom_call.1} parent=11 // pred_check
          %p370 = pneg %p248
        $region42: #{tpu_custom_call.1} parent=11 // pred_check_branch
          %372 = sbr.rel (%p370) target = $region44
        $region43: #{tpu_custom_call.1} parent=11 // pred_region
          _
        $region44: #{tpu_custom_call.1} parent=11 // pred_fallthru
          _
      $region12: #{tpu_custom_call.1} parent=5 // pred_fallthru
        _
      %p373 = scmp.lt.s32.totalorder %s28, 2
      // Predicated region
      $region45: #{tpu_custom_call.1} parent=5 // pred_check
        %p374 = pneg %p373
      $region46: #{tpu_custom_call.1} parent=5 // pred_check_branch
        %376 = sbr.rel (%p374) target = $region48
      $region47: #{tpu_custom_call.1} parent=5 // pred_region
        // Predicated region
        $region49: #{tpu_custom_call.1} parent=47 // pred_check
          %p377 = pneg %p48
        $region50: #{tpu_custom_call.1} parent=47 // pred_check_branch
          %379 = sbr.rel (%p377) target = $region52
        $region51: #{tpu_custom_call.1} parent=47 // pred_region
          %s380 = sand.u32 %s38, 1
          %s381 = scalar_lea.sflag [#allocation3], %s380
          %s382 = sand.u32 %s38, 1
          %s383 = smul.addr %s382, 4
          %s384 = scalar_lea.vmem [#allocation2], %s383
          %s386 = ssub.s32 64, 64
          %387 = vsyncadd %s381, %s386
          %s388 = smul.addr %s28, 64
          %s389 = scalar_lea.hbm %s0, %s388
          %s391 = sshll.u32 %s384, 4
          %s392 = int_to_ptr.vmem [resolvable:$true] %s391
          %394 = dma.hbm_to_vmem [thread:$0]  %s389, 64, %s392, %s381
        $region52: #{tpu_custom_call.1} parent=47 // pred_fallthru
          _
        // Predicated region
        $region53: #{tpu_custom_call.1} parent=47 // pred_check
          %p395 = pneg %p74
        $region54: #{tpu_custom_call.1} parent=47 // pred_check_branch
          %397 = sbr.rel (%p395) target = $region56
        $region55: #{tpu_custom_call.1} parent=47 // pred_region
          %s398 = sand.u32 %s28, 1
          %s399 = scalar_lea.sflag [#allocation6], %s398
          %s400 = sand.u32 %s64, 1
          %s401 = smul.addr %s400, 4
          %s402 = scalar_lea.vmem [#allocation5], %s401
          %s404 = ssub.s32 64, 64
          %405 = vsyncadd %s399, %s404
          %s406 = smul.addr %s28, 64
          %s407 = scalar_lea.hbm %s1, %s406
          %s409 = sshll.u32 %s402, 4
          %s410 = int_to_ptr.vmem [resolvable:$true] %s409
          %412 = dma.hbm_to_vmem [thread:$0]  %s407, 64, %s410, %s399
        $region56: #{tpu_custom_call.1} parent=47 // pred_fallthru
          _
      $region48: #{tpu_custom_call.1} parent=5 // pred_fallthru
        _
      %p413 = scmp.le.s32.totalorder 1, %s28
      %p414 = scmp.lt.s32.totalorder %s28, 3
      %p415 = pnand %p413, %p414
      %p416 = pneg %p415
      // Predicated region
      $region57: #{tpu_custom_call.1} parent=5 // pred_check
        _
      $region58: #{tpu_custom_call.1} parent=5 // pred_check_branch
        %418 = sbr.rel (%p415) target = $region60
      $region59: #{tpu_custom_call.1} parent=5 // pred_region
        %s419 = ssub.s32 %s28, 1
        %s420 = sand.u32 %s41, 1
        %s421 = scalar_lea.sflag [#allocation3], %s420
        %s422 = sand.u32 %s41, 1
        %s423 = smul.addr %s422, 4
        %s424 = scalar_lea.vmem [#allocation2], %s423
        // Predicated region
        $region61: #{tpu_custom_call.1} parent=59 // pred_check
          %p425 = pneg %p54
        $region62: #{tpu_custom_call.1} parent=59 // pred_check_branch
          %427 = sbr.rel (%p425) target = $region64
        $region63: #{tpu_custom_call.1} parent=59 // pred_region
          %428 = dma.done %s421, 64
        $region64: #{tpu_custom_call.1} parent=59 // pred_fallthru
          _
        %s429 = sand.u32 %s33, 1
        %s430 = scalar_lea.sflag [#allocation6], %s429
        %s431 = sand.u32 %s67, 1
        %s432 = smul.addr %s431, 4
        %s433 = scalar_lea.vmem [#allocation5], %s432
        // Predicated region
        $region65: #{tpu_custom_call.1} parent=59 // pred_check
          %p434 = pneg %p80
        $region66: #{tpu_custom_call.1} parent=59 // pred_check_branch
          %436 = sbr.rel (%p434) target = $region68
        $region67: #{tpu_custom_call.1} parent=59 // pred_region
          %437 = dma.done %s430, 64
        $region68: #{tpu_custom_call.1} parent=59 // pred_fallthru
          _
        // Predicated region
        $region69: #{tpu_custom_call.1} parent=59 // pred_check
          %p438 = pneg %p101
        $region70: #{tpu_custom_call.1} parent=59 // pred_check_branch
          %440 = sbr.rel (%p438) target = $region72
        $region71: #{tpu_custom_call.1} parent=59 // pred_region
          %441 = dma.done [#allocation6], 3072
        $region72: #{tpu_custom_call.1} parent=59 // pred_fallthru
          _
        // Predicated region
        $region73: #{tpu_custom_call.1} parent=59 // pred_check
          %p442 = pneg %p143
        $region74: #{tpu_custom_call.1} parent=59 // pred_check_branch
          %444 = sbr.rel (%p442) target = $region76
        $region75: #{tpu_custom_call.1} parent=59 // pred_region
          %445 = dma.done [#allocation9], 1152
        $region76: #{tpu_custom_call.1} parent=59 // pred_fallthru
          _
        // Predicated region
        $region77: #{tpu_custom_call.1} parent=59 // pred_check
          %p446 = pneg %p164
        $region78: #{tpu_custom_call.1} parent=59 // pred_check_branch
          %448 = sbr.rel (%p446) target = $region80
        $region79: #{tpu_custom_call.1} parent=59 // pred_region
          %449 = dma.done [#allocation9], 8192
        $region80: #{tpu_custom_call.1} parent=59 // pred_fallthru
          _
        // Predicated region
        $region81: #{tpu_custom_call.1} parent=59 // pred_check
          %p450 = pneg %p185
        $region82: #{tpu_custom_call.1} parent=59 // pred_check_branch
          %452 = sbr.rel (%p450) target = $region84
        $region83: #{tpu_custom_call.1} parent=59 // pred_region
          %453 = dma.done [#allocation12], 1024
        $region84: #{tpu_custom_call.1} parent=59 // pred_fallthru
          _
        // Predicated region
        $region85: #{tpu_custom_call.1} parent=59 // pred_check
          %p454 = pneg %p206
        $region86: #{tpu_custom_call.1} parent=59 // pred_check_branch
          %456 = sbr.rel (%p454) target = $region88
        $region87: #{tpu_custom_call.1} parent=59 // pred_region
          %457 = dma.done [#allocation12], 1024
        $region88: #{tpu_custom_call.1} parent=59 // pred_fallthru
          _
        // Predicated region
        $region89: #{tpu_custom_call.1} parent=59 // pred_check
          %p458 = pneg %p227
        $region90: #{tpu_custom_call.1} parent=59 // pred_check_branch
          %460 = sbr.rel (%p458) target = $region92
        $region91: #{tpu_custom_call.1} parent=59 // pred_region
          %461 = dma.done [#allocation15], 1024
        $region92: #{tpu_custom_call.1} parent=59 // pred_fallthru
          _
        %s462 = sand.u32 %s41, 1
        %s463 = scalar_lea.sflag [#allocation3], %s462
        %s464 = sand.u32 %s41, 1
        %s465 = smul.addr %s464, 4
        %s466 = scalar_lea.vmem [#allocation2], %s465
        %p467 = pneg %p54
        %p468 = pneg %p51
        %s469 = sand.u32 %s33, 1
        %s470 = scalar_lea.sflag [#allocation6], %s469
        %s471 = sand.u32 %s67, 1
        %s472 = smul.addr %s471, 4
        %s473 = scalar_lea.vmem [#allocation5], %s472
        %p474 = pneg %p80
        %p475 = pneg %p77
        %p476 = pneg %p101
        %p477 = pneg %p98
        %p478 = pneg %p122
        %p479 = pneg %p119
        %p480 = pneg %p143
        %p481 = pneg %p140
        %p482 = pneg %p164
        %p483 = pneg %p161
        %p484 = pneg %p185
        %p485 = pneg %p182
        %p486 = pneg %p206
        %p487 = pneg %p203
        %p488 = pneg %p227
        %p489 = pneg %p224
        %p490 = pneg %p248
        %p491 = pneg %p245
        %p492 = pneg %p274
        %p493 = pneg %p271
        %s494 = sand.u32 %s261, 1
        %s495 = scalar_lea.sflag [#allocation4], %s494
        %s496 = sand.u32 %s261, 1
        %s497 = smul.addr %s496, 8
        %s498 = scalar_lea.vmem [#allocation16], %s497
        %v500 = vld [vmem:[%s424] sm:$0xf]
        %v501 = vld [vmem:[%s433] sm:$0xf]
        %v502 = vld [vmem:[%s9] sm:$0xf]
        %v503 = vunpack.c.l.bf16 %v501
        %v504 = vld [vmem:[#allocation8] sm:$0xff]
        %v505 = vld [vmem:[#allocation8 + $0x8] sm:$0xff]
        %v506 = vld [vmem:[#allocation8 + $0x10] sm:$0xff]
        %v507 = vld [vmem:[#allocation8 + $0x18] sm:$0xff]
        %v508 = vld [vmem:[#allocation8 + $0x20] sm:$0xff]
        %v509 = vld [vmem:[#allocation8 + $0x28] sm:$0xff]
        %v510 = vld [vmem:[#allocation8 + $0x30] sm:$0xff]
        %v511 = vld [vmem:[#allocation8 + $0x38] sm:$0xff]
        %v512 = vld [vmem:[#allocation8 + $0x40] sm:$0xff]
        %vm513 = vcmask 195584
        %v515 = vsel %vm513, %v503, 0
        %517 = vmatprep.subr.mxu0 %v505
        %518 = vmatpush1.msra.mxu0 %v504
        %519 = vmatprep.subr.mxu0 %v508
        %520 = vmatpush1.msra.mxu0 %v507
        %521 = vmatprep.subr.mxu0 %v511
        %522 = vmatpush1.msra.mxu0 %v510
        %523 = vmatprep.subr.mxu0 0.0
        %524 = vmatpush1.msra.mxu0 0.0
        %525 = vmatprep.subr.mxu0 0.0
        %526 = vmatpush1.msra.mxu0 0.0
        %527 = vmatprep.subr.mxu0 0.0
        %528 = vmatpush1.msra.mxu0 0.0
        %529 = vmatprep.subr.mxu0 0.0
        %530 = vmatpush1.msra.mxu0 0.0
        %531 = vmatprep.subr.mxu0 0.0
        %532 = vmatpush1.msra.mxu0 0.0
        %533 = vmatprep.subr.mxu0 0.0
        %534 = vmatpush1.msra.mxu0 0.0
        %535 = vmatprep.subr.mxu0 0.0
        %536 = vmatpush1.msra.mxu0 0.0
        %537 = vmatprep.subr.mxu0 0.0
        %538 = vmatpush1.msra.mxu0 0.0
        %539 = vmatprep.subr.mxu0 0.0
        %540 = vmatpush1.msra.mxu0 0.0
        %541 = vmatprep.subr.mxu0 0.0
        %542 = vmatpush1.msra.mxu0 0.0
        %543 = vmatprep.subr.mxu0 0.0
        %544 = vmatpush1.msra.mxu0 0.0
        %545 = vmatprep.subr.mxu0 0.0
        %546 = vmatpush1.msra.mxu0 0.0
        %547 = vmatprep.subr.mxu0 0.0
        %548 = vmatpush1.msra.mxu0 0.0
        %549 = vmatprep.subr.mxu0 0.0
        %550 = vmatpush1.msra.mxu0 0.0
        %551 = vmatprep.subr.mxu0 0.0
        %552 = vmatpush1.msra.mxu0 0.0
        %553 = vmatprep.subr.mxu0 0.0
        %554 = vmatpush1.msra.mxu0 0.0
        %555 = vmatprep.subr.mxu0 0.0
        %556 = vmatpush1.msra.mxu0 0.0
        %557 = vmatprep.subr.mxu0 0.0
        %558 = vmatpush1.msra.mxu0 0.0
        %559 = vmatprep.subr.mxu0 0.0
        %560 = vmatpush1.msra.mxu0 0.0
        %561 = vmatprep.subr.mxu0 0.0
        %562 = vmatpush1.msra.mxu0 0.0
        %563 = vmatprep.subr.mxu0 0.0
        %564 = vmatpush1.msra.mxu0 0.0
        %565 = vmatprep.subr.mxu0 0.0
        %566 = vmatpush1.msra.mxu0 0.0
        %567 = vmatprep.subr.mxu0 0.0
        %568 = vmatpush1.msra.mxu0 0.0
        %569 = vmatprep.subr.mxu0 0.0
        %570 = vmatpush1.msra.mxu0 0.0
        %571 = vmatprep.subr.mxu0 0.0
        %572 = vmatpush1.msra.mxu0 0.0
        %573 = vmatprep.subr.mxu0 0.0
        %574 = vmatpush1.msra.mxu0 0.0
        %575 = vmatprep.subr.mxu0 0.0
        %576 = vmatpush1.msra.mxu0 0.0
        %577 = vmatprep.subr.mxu0 0.0
        %578 = vmatpush1.msra.mxu0 0.0
        %579 = vmatprep.subr.mxu0 0.0
        %580 = vmatpush1.msra.mxu0 0.0
        %581 = vmatprep.mubr.f32.mxu0 0.0
        %582 = vmatmul.mubr.f32.gmra.mrb[0].mxu0 %v515
        %v583 = vpop.f32.mrb[0].mxu0
        %v584 = vadd.f32 0.0, %v583
        %v585 = vpop.f32.mrb[0].mxu0
        %v586 = vadd.f32 0.0, %v585
        %587 = vdwg.mxu0
        %588 = vmatprep.subr.mxu0 0.0
        %589 = vmatpush1.msra.mxu0 %v506
        %590 = vmatprep.subr.mxu0 0.0
        %591 = vmatpush1.msra.mxu0 %v509
        %592 = vmatprep.subr.mxu0 0.0
        %593 = vmatpush1.msra.mxu0 %v512
        %594 = vmatprep.subr.mxu0 0.0
        %595 = vmatpush1.msra.mxu0 0.0
        %596 = vmatprep.subr.mxu0 0.0
        %597 = vmatpush1.msra.mxu0 0.0
        %598 = vmatprep.subr.mxu0 0.0
        %599 = vmatpush1.msra.mxu0 0.0
        %600 = vmatprep.subr.mxu0 0.0
        %601 = vmatpush1.msra.mxu0 0.0
        %602 = vmatprep.subr.mxu0 0.0
        %603 = vmatpush1.msra.mxu0 0.0
        %604 = vmatprep.subr.mxu0 0.0
        %605 = vmatpush1.msra.mxu0 0.0
        %606 = vmatprep.subr.mxu0 0.0
        %607 = vmatpush1.msra.mxu0 0.0
        %608 = vmatprep.subr.mxu0 0.0
        %609 = vmatpush1.msra.mxu0 0.0
        %610 = vmatprep.subr.mxu0 0.0
        %611 = vmatpush1.msra.mxu0 0.0
        %612 = vmatprep.subr.mxu0 0.0
        %613 = vmatpush1.msra.mxu0 0.0
        %614 = vmatprep.subr.mxu0 0.0
        %615 = vmatpush1.msra.mxu0 0.0
        %616 = vmatprep.subr.mxu0 0.0
        %617 = vmatpush1.msra.mxu0 0.0
        %618 = vmatprep.subr.mxu0 0.0
        %619 = vmatpush1.msra.mxu0 0.0
        %620 = vmatprep.subr.mxu0 0.0
        %621 = vmatpush1.msra.mxu0 0.0
        %622 = vmatprep.subr.mxu0 0.0
        %623 = vmatpush1.msra.mxu0 0.0
        %624 = vmatprep.subr.mxu0 0.0
        %625 = vmatpush1.msra.mxu0 0.0
        %626 = vmatprep.subr.mxu0 0.0
        %627 = vmatpush1.msra.mxu0 0.0
        %628 = vmatprep.subr.mxu0 0.0
        %629 = vmatpush1.msra.mxu0 0.0
        %630 = vmatprep.subr.mxu0 0.0
        %631 = vmatpush1.msra.mxu0 0.0
        %632 = vmatprep.subr.mxu0 0.0
        %633 = vmatpush1.msra.mxu0 0.0
        %634 = vmatprep.subr.mxu0 0.0
        %635 = vmatpush1.msra.mxu0 0.0
        %636 = vmatprep.subr.mxu0 0.0
        %637 = vmatpush1.msra.mxu0 0.0
        %638 = vmatprep.subr.mxu0 0.0
        %639 = vmatpush1.msra.mxu0 0.0
        %640 = vmatprep.subr.mxu0 0.0
        %641 = vmatpush1.msra.mxu0 0.0
        %642 = vmatprep.subr.mxu0 0.0
        %643 = vmatpush1.msra.mxu0 0.0
        %644 = vmatprep.subr.mxu0 0.0
        %645 = vmatpush1.msra.mxu0 0.0
        %646 = vmatprep.subr.mxu0 0.0
        %647 = vmatpush1.msra.mxu0 0.0
        %648 = vmatprep.subr.mxu0 0.0
        %649 = vmatpush1.msra.mxu0 0.0
        %650 = vmatprep.subr.mxu0 0.0
        %651 = vmatpush1.msra.mxu0 0.0
        %652 = vmatprep.mubr.f32.mxu0 0.0
        %653 = vmatmul.mubr.f32.gmra.mrb[0].mxu0 %v515
        %v654 = vpop.f32.mrb[0].mxu0
        %v655 = vadd.f32 0.0, %v654
        %v656 = vpop.f32.mrb[0].mxu0
        %657 = vdwg.mxu0
        %v658 = vld [vmem:[#allocation7] sm:$0xff]
        %v659 = vld [vmem:[#allocation7 + $0x8] sm:$0xff]
        %v660 = vld [vmem:[#allocation7 + $0x10] sm:$0xff]
        %v661 = vld [vmem:[#allocation7 + $0x18] sm:$0xff]
        %v662 = vld [vmem:[#allocation7 + $0x20] sm:$0xff]
        %v663 = vld [vmem:[#allocation7 + $0x28] sm:$0xff]
        %v664 = vld [vmem:[#allocation7 + $0x30] sm:$0xff]
        %v665 = vld [vmem:[#allocation7 + $0x38] sm:$0xff]
        %v666 = vld [vmem:[#allocation7 + $0x40] sm:$0xff]
        %v667 = vld [vmem:[#allocation7 + $0x48] sm:$0xff]
        %v668 = vld [vmem:[#allocation7 + $0x50] sm:$0xff]
        %v669 = vld [vmem:[#allocation7 + $0x58] sm:$0xff]
        %v670 = vld [vmem:[#allocation7 + $0x60] sm:$0xff]
        %v671 = vld [vmem:[#allocation7 + $0x68] sm:$0xff]
        %v672 = vld [vmem:[#allocation7 + $0x70] sm:$0xff]
        %v673 = vld [vmem:[#allocation7 + $0x78] sm:$0xff]
        %v674 = vld [vmem:[#allocation7 + $0x80] sm:$0xff]
        %v675 = vld [vmem:[#allocation7 + $0x88] sm:$0xff]
        %v676 = vld [vmem:[#allocation7 + $0x90] sm:$0xff]
        %v677 = vld [vmem:[#allocation7 + $0x98] sm:$0xff]
        %v678 = vld [vmem:[#allocation7 + $0xa0] sm:$0x11]
        %v679 = vld [vmem:[#allocation7 + $0xa8] sm:$0x11]
        %v680 = vld [vmem:[#allocation7 + $0xb0] sm:$0x11]
        %v681 = vld [vmem:[#allocation7 + $0xb8] sm:$0x11]
        %v706 = vunpack.c.l.b16 %v658
        %v707 = vunpack.c.h.b16 %v658
        %v708 = vunpack.c.l.b16 %v659
        %v709 = vunpack.c.h.b16 %v659
        %v710 = vunpack.c.l.b16 %v660
        %v711 = vunpack.c.h.b16 %v660
        %v712 = vunpack.c.l.b16 %v661
        %v713 = vunpack.c.h.b16 %v661
        %v714 = vunpack.c.l.b16 %v662
        %v715 = vunpack.c.h.b16 %v662
        %v716 = vunpack.c.l.b16 %v663
        %v717 = vunpack.c.h.b16 %v663
        %v718 = vunpack.c.l.b16 %v664
        %v719 = vunpack.c.h.b16 %v664
        %v720 = vunpack.c.l.b16 %v665
        %v721 = vunpack.c.h.b16 %v665
        %v722 = vunpack.c.l.b16 %v666
        %v723 = vunpack.c.h.b16 %v666
        %v724 = vunpack.c.l.b16 %v667
        %v725 = vunpack.c.h.b16 %v667
        %v726 = vunpack.c.l.b16 %v668
        %v727 = vunpack.c.h.b16 %v668
        %v728 = vunpack.c.l.b16 %v669
        %v729 = vunpack.c.h.b16 %v669
        %v730 = vunpack.c.l.b16 %v670
        %v731 = vunpack.c.h.b16 %v670
        %v732 = vunpack.c.l.b16 %v671
        %v733 = vunpack.c.h.b16 %v671
        %v734 = vunpack.c.l.b16 %v672
        %v735 = vunpack.c.h.b16 %v672
        %v736 = vunpack.c.l.b16 %v673
        %v737 = vunpack.c.h.b16 %v673
        %v738 = vunpack.c.l.b16 %v674
        %v739 = vunpack.c.h.b16 %v674
        %v740 = vunpack.c.l.b16 %v675
        %v741 = vunpack.c.h.b16 %v675
        %v742 = vunpack.c.l.b16 %v676
        %v743 = vunpack.c.h.b16 %v676
        %v744 = vunpack.c.l.b16 %v677
        %v745 = vunpack.c.h.b16 %v677
        %v746 = vunpack.c.l.b16 %v678
        %v747 = vunpack.c.h.b16 %v678
        %v748 = vunpack.c.l.b16 %v679
        %v749 = vunpack.c.h.b16 %v679
        %v750 = vunpack.c.l.b16 %v680
        %v751 = vunpack.c.h.b16 %v680
        %v752 = vunpack.c.l.b16 %v681
        %v753 = vunpack.c.h.b16 %v681
        %v754 = vpack.c.b16 %v714, %v706
        %v755 = vpack.c.b16 %v715, %v707
        %v756 = vpack.c.b16 %v716, %v708
        %v757 = vpack.c.b16 %v717, %v709
        %v758 = vpack.c.b16 %v718, %v710
        %v759 = vpack.c.b16 %v719, %v711
        %v760 = vpack.c.b16 %v720, %v712
        %v761 = vpack.c.b16 %v721, %v713
        %v762 = vpack.c.b16 %v730, %v722
        %v763 = vpack.c.b16 %v731, %v723
        %v764 = vpack.c.b16 %v732, %v724
        %v765 = vpack.c.b16 %v733, %v725
        %v766 = vpack.c.b16 %v734, %v726
        %v767 = vpack.c.b16 %v735, %v727
        %v768 = vpack.c.b16 %v736, %v728
        %v769 = vpack.c.b16 %v737, %v729
        %v770 = vpack.c.b16 %v746, %v738
        %v771 = vpack.c.b16 %v747, %v739
        %v772 = vpack.c.b16 %v748, %v740
        %v773 = vpack.c.b16 %v749, %v741
        %v774 = vpack.c.b16 %v750, %v742
        %v775 = vpack.c.b16 %v751, %v743
        %v776 = vpack.c.b16 %v752, %v744
        %v777 = vpack.c.b16 %v753, %v745
        %vm794 = vcmask 343040
        %v796 = vsel %vm794, %v500, 0
        %vm798 = vcmask 1044480
        %v800 = vsel %vm798, %v770, 0
        %v803 = vsel %vm798, %v771, 0
        %v806 = vsel %vm798, %v772, 0
        %v809 = vsel %vm798, %v773, 0
        %v812 = vsel %vm798, %v774, 0
        %v815 = vsel %vm798, %v775, 0
        %v818 = vsel %vm798, %v776, 0
        %v821 = vsel %vm798, %v777, 0
        %823 = vmatprep.subr.bf16.mxu0 %v755
        %824 = vmatpush1.bf16.msra.mxu0 %v754
        %825 = vmatprep.subr.bf16.mxu0 %v763
        %826 = vmatpush1.bf16.msra.mxu0 %v762
        %827 = vmatprep.subr.bf16.mxu0 %v803
        %828 = vmatpush1.bf16.msra.mxu0 %v800
        %829 = vmatprep.subr.bf16.mxu0 0
        %830 = vmatpush1.bf16.msra.mxu0 0
        %831 = vmatprep.subr.bf16.mxu0 0
        %832 = vmatpush1.bf16.msra.mxu0 0
        %833 = vmatprep.subr.bf16.mxu0 0
        %834 = vmatpush1.bf16.msra.mxu0 0
        %835 = vmatprep.subr.bf16.mxu0 0
        %836 = vmatpush1.bf16.msra.mxu0 0
        %837 = vmatprep.subr.bf16.mxu0 0
        %838 = vmatpush1.bf16.msra.mxu0 0
        %839 = vmatprep.subr.bf16.mxu0 0
        %840 = vmatpush1.bf16.msra.mxu0 0
        %841 = vmatprep.subr.bf16.mxu0 0
        %842 = vmatpush1.bf16.msra.mxu0 0
        %843 = vmatprep.subr.bf16.mxu0 0
        %844 = vmatpush1.bf16.msra.mxu0 0
        %845 = vmatprep.subr.bf16.mxu0 0
        %846 = vmatpush1.bf16.msra.mxu0 0
        %847 = vmatprep.subr.bf16.mxu0 0
        %848 = vmatpush1.bf16.msra.mxu0 0
        %849 = vmatprep.subr.bf16.mxu0 0
        %850 = vmatpush1.bf16.msra.mxu0 0
        %851 = vmatprep.subr.bf16.mxu0 0
        %852 = vmatpush1.bf16.msra.mxu0 0
        %853 = vmatprep.subr.bf16.mxu0 0
        %854 = vmatpush1.bf16.msra.mxu0 0
        %855 = vmatprep.mubr.bf16.mxu0 0
        %856 = vmatmul.mubr.bf16.gmra.mrb[0].mxu0 %v796
        %v857 = vpop.f32.mrb[0].mxu0
        %v858 = vadd.f32 0.0, %v857
        %v859 = vpop.f32.mrb[0].mxu0
        %v860 = vadd.f32 0.0, %v859
        %v861 = vpop.f32.mrb[0].mxu0
        %v862 = vpop.f32.mrb[0].mxu0
        %863 = vdwg.mxu0
        %864 = vmatprep.subr.bf16.mxu0 %v757
        %865 = vmatpush1.bf16.msra.mxu0 %v756
        %866 = vmatprep.subr.bf16.mxu0 %v765
        %867 = vmatpush1.bf16.msra.mxu0 %v764
        %868 = vmatprep.subr.bf16.mxu0 %v809
        %869 = vmatpush1.bf16.msra.mxu0 %v806
        %870 = vmatprep.subr.bf16.mxu0 0
        %871 = vmatpush1.bf16.msra.mxu0 0
        %872 = vmatprep.subr.bf16.mxu0 0
        %873 = vmatpush1.bf16.msra.mxu0 0
        %874 = vmatprep.subr.bf16.mxu0 0
        %875 = vmatpush1.bf16.msra.mxu0 0
        %876 = vmatprep.subr.bf16.mxu0 0
        %877 = vmatpush1.bf16.msra.mxu0 0
        %878 = vmatprep.subr.bf16.mxu0 0
        %879 = vmatpush1.bf16.msra.mxu0 0
        %880 = vmatprep.subr.bf16.mxu0 0
        %881 = vmatpush1.bf16.msra.mxu0 0
        %882 = vmatprep.subr.bf16.mxu0 0
        %883 = vmatpush1.bf16.msra.mxu0 0
        %884 = vmatprep.subr.bf16.mxu0 0
        %885 = vmatpush1.bf16.msra.mxu0 0
        %886 = vmatprep.subr.bf16.mxu0 0
        %887 = vmatpush1.bf16.msra.mxu0 0
        %888 = vmatprep.subr.bf16.mxu0 0
        %889 = vmatpush1.bf16.msra.mxu0 0
        %890 = vmatprep.subr.bf16.mxu0 0
        %891 = vmatpush1.bf16.msra.mxu0 0
        %892 = vmatprep.subr.bf16.mxu0 0
        %893 = vmatpush1.bf16.msra.mxu0 0
        %894 = vmatprep.subr.bf16.mxu0 0
        %895 = vmatpush1.bf16.msra.mxu0 0
        %896 = vmatprep.mubr.bf16.mxu0 0
        %897 = vmatmul.mubr.bf16.gmra.mrb[0].mxu0 %v796
        %v898 = vpop.f32.mrb[0].mxu0
        %v899 = vadd.f32 0.0, %v898
        %v900 = vpop.f32.mrb[0].mxu0
        %v901 = vadd.f32 0.0, %v900
        %v902 = vpop.f32.mrb[0].mxu0
        %v903 = vpop.f32.mrb[0].mxu0
        %904 = vdwg.mxu0
        %905 = vmatprep.subr.bf16.mxu0 %v759
        %906 = vmatpush1.bf16.msra.mxu0 %v758
        %907 = vmatprep.subr.bf16.mxu0 %v767
        %908 = vmatpush1.bf16.msra.mxu0 %v766
        %909 = vmatprep.subr.bf16.mxu0 %v815
        %910 = vmatpush1.bf16.msra.mxu0 %v812
        %911 = vmatprep.subr.bf16.mxu0 0
        %912 = vmatpush1.bf16.msra.mxu0 0
        %913 = vmatprep.subr.bf16.mxu0 0
        %914 = vmatpush1.bf16.msra.mxu0 0
        %915 = vmatprep.subr.bf16.mxu0 0
        %916 = vmatpush1.bf16.msra.mxu0 0
        %917 = vmatprep.subr.bf16.mxu0 0
        %918 = vmatpush1.bf16.msra.mxu0 0
        %919 = vmatprep.subr.bf16.mxu0 0
        %920 = vmatpush1.bf16.msra.mxu0 0
        %921 = vmatprep.subr.bf16.mxu0 0
        %922 = vmatpush1.bf16.msra.mxu0 0
        %923 = vmatprep.subr.bf16.mxu0 0
        %924 = vmatpush1.bf16.msra.mxu0 0
        %925 = vmatprep.subr.bf16.mxu0 0
        %926 = vmatpush1.bf16.msra.mxu0 0
        %927 = vmatprep.subr.bf16.mxu0 0
        %928 = vmatpush1.bf16.msra.mxu0 0
        %929 = vmatprep.subr.bf16.mxu0 0
        %930 = vmatpush1.bf16.msra.mxu0 0
        %931 = vmatprep.subr.bf16.mxu0 0
        %932 = vmatpush1.bf16.msra.mxu0 0
        %933 = vmatprep.subr.bf16.mxu0 0
        %934 = vmatpush1.bf16.msra.mxu0 0
        %935 = vmatprep.subr.bf16.mxu0 0
        %936 = vmatpush1.bf16.msra.mxu0 0
        %937 = vmatprep.mubr.bf16.mxu0 0
        %938 = vmatmul.mubr.bf16.gmra.mrb[0].mxu0 %v796
        %v939 = vpop.f32.mrb[0].mxu0
        %v940 = vadd.f32 0.0, %v939
        %v941 = vpop.f32.mrb[0].mxu0
        %v942 = vadd.f32 0.0, %v941
        %v943 = vpop.f32.mrb[0].mxu0
        %v944 = vpop.f32.mrb[0].mxu0
        %945 = vdwg.mxu0
        %946 = vmatprep.subr.bf16.mxu0 %v761
        %947 = vmatpush1.bf16.msra.mxu0 %v760
        %948 = vmatprep.subr.bf16.mxu0 %v769
        %949 = vmatpush1.bf16.msra.mxu0 %v768
        %950 = vmatprep.subr.bf16.mxu0 %v821
        %951 = vmatpush1.bf16.msra.mxu0 %v818
        %952 = vmatprep.subr.bf16.mxu0 0
        %953 = vmatpush1.bf16.msra.mxu0 0
        %954 = vmatprep.subr.bf16.mxu0 0
        %955 = vmatpush1.bf16.msra.mxu0 0
        %956 = vmatprep.subr.bf16.mxu0 0
        %957 = vmatpush1.bf16.msra.mxu0 0
        %958 = vmatprep.subr.bf16.mxu0 0
        %959 = vmatpush1.bf16.msra.mxu0 0
        %960 = vmatprep.subr.bf16.mxu0 0
        %961 = vmatpush1.bf16.msra.mxu0 0
        %962 = vmatprep.subr.bf16.mxu0 0
        %963 = vmatpush1.bf16.msra.mxu0 0
        %964 = vmatprep.subr.bf16.mxu0 0
        %965 = vmatpush1.bf16.msra.mxu0 0
        %966 = vmatprep.subr.bf16.mxu0 0
        %967 = vmatpush1.bf16.msra.mxu0 0
        %968 = vmatprep.subr.bf16.mxu0 0
        %969 = vmatpush1.bf16.msra.mxu0 0
        %970 = vmatprep.subr.bf16.mxu0 0
        %971 = vmatpush1.bf16.msra.mxu0 0
        %972 = vmatprep.subr.bf16.mxu0 0
        %973 = vmatpush1.bf16.msra.mxu0 0
        %974 = vmatprep.subr.bf16.mxu0 0
        %975 = vmatpush1.bf16.msra.mxu0 0
        %976 = vmatprep.subr.bf16.mxu0 0
        %977 = vmatpush1.bf16.msra.mxu0 0
        %978 = vmatprep.mubr.bf16.mxu0 0
        %979 = vmatmul.mubr.bf16.gmra.mrb[0].mxu0 %v796
        %v980 = vpop.f32.mrb[0].mxu0
        %v981 = vadd.f32 0.0, %v980
        %v982 = vpop.f32.mrb[0].mxu0
        %v983 = vadd.f32 0.0, %v982
        %v984 = vpop.f32.mrb[0].mxu0
        %v985 = vpop.f32.mrb[0].mxu0
        %986 = vdwg.mxu0
        %v987 = vld [vmem:[%s3] sm:$0xff]
        %988 = vset.pattern.permute.xlu0 22
        %989 = vperm.xlu0 %988, %v503
        %v990 = vpop.permute.xlu0 %989
        %v993 = vlaneseq
        %v994 = vshrl.u32 %v993, 7
        %v995 = vsub.s32 0, %v994
        %v996 = vrot.slane %v987, %v995
        %v997 = vlaneseq
        %v998 = vshrl.u32 %v997, 7
        %v999 = vsub.s32 1, %v998
        %v1000 = vrot.slane %v987, %v999
        %v1001 = vlaneseq
        %v1002 = vshrl.u32 %v1001, 7
        %v1003 = vsub.s32 2, %v1002
        %v1004 = vrot.slane %v987, %v1003
        %v1005 = vlaneseq
        %v1006 = vshrl.u32 %v1005, 7
        %v1007 = vsub.s32 3, %v1006
        %v1008 = vrot.slane %v987, %v1007
        %v1009 = vlaneseq
        %v1010 = vshrl.u32 %v1009, 7
        %v1011 = vsub.s32 4, %v1010
        %v1012 = vrot.slane %v987, %v1011
        %v1013 = vlaneseq
        %v1014 = vshrl.u32 %v1013, 7
        %v1015 = vsub.s32 5, %v1014
        %v1016 = vrot.slane %v987, %v1015
        %v1017 = vlaneseq
        %v1018 = vshrl.u32 %v1017, 7
        %v1019 = vsub.s32 6, %v1018
        %v1020 = vrot.slane %v987, %v1019
        %v1021 = vlaneseq
        %v1022 = vshrl.u32 %v1021, 7
        %v1023 = vsub.s32 7, %v1022
        %v1024 = vrot.slane %v987, %v1023
        %vm1033 = vcmp.eq.f32.partialorder %v990, %v996
        %vm1034 = vcmp.eq.f32.partialorder %v990, %v1000
        %vm1035 = vcmp.eq.f32.partialorder %v990, %v1004
        %vm1036 = vcmp.eq.f32.partialorder %v990, %v1008
        %vm1037 = vcmp.eq.f32.partialorder %v990, %v1012
        %vm1038 = vcmp.eq.f32.partialorder %v990, %v1016
        %vm1039 = vcmp.eq.f32.partialorder %v990, %v1020
        %vm1040 = vcmp.eq.f32.partialorder %v990, %v1024
        %v1041 = vsel %vm1033, %v858, 0.0
        %v1042 = vsel %vm1034, %v860, 0.0
        %v1043 = vsel %vm1035, %v899, 0.0
        %v1044 = vsel %vm1036, %v901, 0.0
        %v1045 = vsel %vm1037, %v940, 0.0
        %v1046 = vsel %vm1038, %v942, 0.0
        %v1047 = vsel %vm1039, %v981, 0.0
        %v1048 = vsel %vm1040, %v983, 0.0
        %v1049 = vpack.c.bf16 %v1041, %v1041
        %v1050 = vpack.c.bf16 %v1042, %v1042
        %v1051 = vpack.c.bf16 %v1043, %v1043
        %v1052 = vpack.c.bf16 %v1044, %v1044
        %v1053 = vpack.c.bf16 %v1045, %v1045
        %v1054 = vpack.c.bf16 %v1046, %v1046
        %v1055 = vpack.c.bf16 %v1047, %v1047
        %v1056 = vpack.c.bf16 %v1048, %v1048
        %v1057 = vld [vmem:[#allocation10] sm:$0xf]
        %v1058 = vld [vmem:[#allocation10 + $0x4] sm:$0xf]
        %v1059 = vld [vmem:[#allocation10 + $0x8] sm:$0xf]
        %v1060 = vld [vmem:[#allocation10 + $0xc] sm:$0xf]
        %v1061 = vld [vmem:[#allocation10 + $0x10] sm:$0xf]
        %v1062 = vld [vmem:[#allocation10 + $0x14] sm:$0xf]
        %v1063 = vld [vmem:[#allocation10 + $0x18] sm:$0xf]
        %v1064 = vld [vmem:[#allocation10 + $0x1c] sm:$0xf]
        %v1065 = vld [vmem:[#allocation10 + $0x20] sm:$0xf]
        %v1066 = vld [vmem:[#allocation10 + $0x24] sm:$0xf]
        %v1067 = vld [vmem:[#allocation10 + $0x28] sm:$0xf]
        %v1068 = vld [vmem:[#allocation10 + $0x2c] sm:$0xf]
        %v1069 = vld [vmem:[#allocation10 + $0x30] sm:$0xf]
        %v1070 = vld [vmem:[#allocation10 + $0x34] sm:$0xf]
        %v1071 = vld [vmem:[#allocation10 + $0x38] sm:$0xf]
        %v1072 = vld [vmem:[#allocation10 + $0x3c] sm:$0xf]
        %v1073 = vld [vmem:[#allocation10 + $0x40] sm:$0xf]
        %v1074 = vld [vmem:[#allocation10 + $0x44] sm:$0xf]
        %v1075 = vld [vmem:[#allocation10 + $0x48] sm:$0xf]
        %v1076 = vld [vmem:[#allocation10 + $0x4c] sm:$0xf]
        %v1077 = vld [vmem:[#allocation10 + $0x50] sm:$0xf]
        %v1078 = vld [vmem:[#allocation10 + $0x54] sm:$0xf]
        %v1079 = vld [vmem:[#allocation10 + $0x58] sm:$0xf]
        %v1080 = vld [vmem:[#allocation10 + $0x5c] sm:$0xf]
        %v1081 = vld [vmem:[#allocation10 + $0x60] sm:$0xf]
        %v1082 = vld [vmem:[#allocation10 + $0x64] sm:$0xf]
        %v1083 = vld [vmem:[#allocation10 + $0x68] sm:$0xf]
        %v1084 = vld [vmem:[#allocation10 + $0x6c] sm:$0xf]
        %v1085 = vld [vmem:[#allocation10 + $0x70] sm:$0xf]
        %v1086 = vld [vmem:[#allocation10 + $0x74] sm:$0xf]
        %v1087 = vld [vmem:[#allocation10 + $0x78] sm:$0xf]
        %v1088 = vld [vmem:[#allocation10 + $0x7c] sm:$0xf]
        %v1089 = vld [vmem:[#allocation10 + $0x80] sm:$0xf]
        %v1090 = vld [vmem:[#allocation10 + $0x84] sm:$0xf]
        %v1091 = vld [vmem:[#allocation10 + $0x88] sm:$0xf]
        %v1092 = vld [vmem:[#allocation10 + $0x8c] sm:$0xf]
        %v1093 = vld [vmem:[#allocation10 + $0x90] sm:$0xf]
        %v1094 = vld [vmem:[#allocation10 + $0x94] sm:$0xf]
        %v1095 = vld [vmem:[#allocation10 + $0x98] sm:$0xf]
        %v1096 = vld [vmem:[#allocation10 + $0x9c] sm:$0xf]
        %v1097 = vld [vmem:[#allocation10 + $0xa0] sm:$0xf]
        %v1098 = vld [vmem:[#allocation10 + $0xa4] sm:$0xf]
        %v1099 = vld [vmem:[#allocation10 + $0xa8] sm:$0xf]
        %v1100 = vld [vmem:[#allocation10 + $0xac] sm:$0xf]
        %v1101 = vld [vmem:[#allocation10 + $0xb0] sm:$0xf]
        %v1102 = vld [vmem:[#allocation10 + $0xb4] sm:$0xf]
        %v1103 = vld [vmem:[#allocation10 + $0xb8] sm:$0xf]
        %v1104 = vld [vmem:[#allocation10 + $0xbc] sm:$0xf]
        %v1105 = vld [vmem:[#allocation10 + $0xc0] sm:$0xf]
        %v1106 = vld [vmem:[#allocation10 + $0xc4] sm:$0xf]
        %v1107 = vld [vmem:[#allocation10 + $0xc8] sm:$0xf]
        %v1108 = vld [vmem:[#allocation10 + $0xcc] sm:$0xf]
        %v1109 = vld [vmem:[#allocation10 + $0xd0] sm:$0xf]
        %v1110 = vld [vmem:[#allocation10 + $0xd4] sm:$0xf]
        %v1111 = vld [vmem:[#allocation10 + $0xd8] sm:$0xf]
        %v1112 = vld [vmem:[#allocation10 + $0xdc] sm:$0xf]
        %v1113 = vld [vmem:[#allocation10 + $0xe0] sm:$0xf]
        %v1114 = vld [vmem:[#allocation10 + $0xe4] sm:$0xf]
        %v1115 = vld [vmem:[#allocation10 + $0xe8] sm:$0xf]
        %v1116 = vld [vmem:[#allocation10 + $0xec] sm:$0xf]
        %v1117 = vld [vmem:[#allocation10 + $0xf0] sm:$0xf]
        %v1118 = vld [vmem:[#allocation10 + $0xf4] sm:$0xf]
        %v1119 = vld [vmem:[#allocation10 + $0xf8] sm:$0xf]
        %v1120 = vld [vmem:[#allocation10 + $0xfc] sm:$0xf]
        %v1121 = vld [vmem:[#allocation10 + $0x100] sm:$0xf]
        %v1122 = vld [vmem:[#allocation10 + $0x104] sm:$0xf]
        %v1123 = vld [vmem:[#allocation10 + $0x108] sm:$0xf]
        %v1124 = vld [vmem:[#allocation10 + $0x10c] sm:$0xf]
        %v1125 = vld [vmem:[#allocation10 + $0x110] sm:$0xf]
        %v1126 = vld [vmem:[#allocation10 + $0x114] sm:$0xf]
        %v1127 = vld [vmem:[#allocation10 + $0x118] sm:$0xf]
        %v1128 = vld [vmem:[#allocation10 + $0x11c] sm:$0xf]
        %v1129 = vld [vmem:[#allocation10 + $0x120] sm:$0xf]
        %v1130 = vld [vmem:[#allocation10 + $0x124] sm:$0xf]
        %v1131 = vld [vmem:[#allocation10 + $0x128] sm:$0xf]
        %v1132 = vld [vmem:[#allocation10 + $0x12c] sm:$0xf]
        %v1133 = vld [vmem:[#allocation10 + $0x130] sm:$0xf]
        %v1134 = vld [vmem:[#allocation10 + $0x134] sm:$0xf]
        %v1135 = vld [vmem:[#allocation10 + $0x138] sm:$0xf]
        %v1136 = vld [vmem:[#allocation10 + $0x13c] sm:$0xf]
        %v1137 = vld [vmem:[#allocation10 + $0x140] sm:$0xf]
        %v1138 = vld [vmem:[#allocation10 + $0x144] sm:$0xf]
        %v1139 = vld [vmem:[#allocation10 + $0x148] sm:$0xf]
        %v1140 = vld [vmem:[#allocation10 + $0x14c] sm:$0xf]
        %v1141 = vld [vmem:[#allocation10 + $0x150] sm:$0xf]
        %v1142 = vld [vmem:[#allocation10 + $0x154] sm:$0xf]
        %v1143 = vld [vmem:[#allocation10 + $0x158] sm:$0xf]
        %v1144 = vld [vmem:[#allocation10 + $0x15c] sm:$0xf]
        %v1145 = vld [vmem:[#allocation10 + $0x160] sm:$0xf]
        %v1146 = vld [vmem:[#allocation10 + $0x164] sm:$0xf]
        %v1147 = vld [vmem:[#allocation10 + $0x168] sm:$0xf]
        %v1148 = vld [vmem:[#allocation10 + $0x16c] sm:$0xf]
        %v1149 = vld [vmem:[#allocation10 + $0x170] sm:$0xf]
        %v1150 = vld [vmem:[#allocation10 + $0x174] sm:$0xf]
        %v1151 = vld [vmem:[#allocation10 + $0x178] sm:$0xf]
        %v1152 = vld [vmem:[#allocation10 + $0x17c] sm:$0xf]
        %v1153 = vld [vmem:[#allocation10 + $0x180] sm:$0xf]
        %v1154 = vld [vmem:[#allocation10 + $0x184] sm:$0xf]
        %v1155 = vld [vmem:[#allocation10 + $0x188] sm:$0xf]
        %v1156 = vld [vmem:[#allocation10 + $0x18c] sm:$0xf]
        %v1157 = vld [vmem:[#allocation10 + $0x190] sm:$0xf]
        %v1158 = vld [vmem:[#allocation10 + $0x194] sm:$0xf]
        %v1159 = vld [vmem:[#allocation10 + $0x198] sm:$0xf]
        %v1160 = vld [vmem:[#allocation10 + $0x19c] sm:$0xf]
        %v1161 = vld [vmem:[#allocation10 + $0x1a0] sm:$0xf]
        %v1162 = vld [vmem:[#allocation10 + $0x1a4] sm:$0xf]
        %v1163 = vld [vmem:[#allocation10 + $0x1a8] sm:$0xf]
        %v1164 = vld [vmem:[#allocation10 + $0x1ac] sm:$0xf]
        %v1165 = vld [vmem:[#allocation10 + $0x1b0] sm:$0xf]
        %v1166 = vld [vmem:[#allocation10 + $0x1b4] sm:$0xf]
        %v1167 = vld [vmem:[#allocation10 + $0x1b8] sm:$0xf]
        %v1168 = vld [vmem:[#allocation10 + $0x1bc] sm:$0xf]
        %v1169 = vld [vmem:[#allocation10 + $0x1c0] sm:$0xf]
        %v1170 = vld [vmem:[#allocation10 + $0x1c4] sm:$0xf]
        %v1171 = vld [vmem:[#allocation10 + $0x1c8] sm:$0xf]
        %v1172 = vld [vmem:[#allocation10 + $0x1cc] sm:$0xf]
        %v1173 = vld [vmem:[#allocation10 + $0x1d0] sm:$0xf]
        %v1174 = vld [vmem:[#allocation10 + $0x1d4] sm:$0xf]
        %v1175 = vld [vmem:[#allocation10 + $0x1d8] sm:$0xf]
        %v1176 = vld [vmem:[#allocation10 + $0x1dc] sm:$0xf]
        %v1177 = vld [vmem:[#allocation10 + $0x1e0] sm:$0xf]
        %v1178 = vld [vmem:[#allocation10 + $0x1e4] sm:$0xf]
        %v1179 = vld [vmem:[#allocation10 + $0x1e8] sm:$0xf]
        %v1180 = vld [vmem:[#allocation10 + $0x1ec] sm:$0xf]
        %v1181 = vld [vmem:[#allocation10 + $0x1f0] sm:$0xf]
        %v1182 = vld [vmem:[#allocation10 + $0x1f4] sm:$0xf]
        %v1183 = vld [vmem:[#allocation10 + $0x1f8] sm:$0xf]
        %v1184 = vld [vmem:[#allocation10 + $0x1fc] sm:$0xf]
        %v1313 = vunpack.c.l.b16 %v1057
        %v1314 = vunpack.c.l.b16 %v1058
        %v1315 = vunpack.c.l.b16 %v1059
        %v1316 = vunpack.c.l.b16 %v1060
        %v1317 = vunpack.c.l.b16 %v1061
        %v1318 = vunpack.c.l.b16 %v1062
        %v1319 = vunpack.c.l.b16 %v1063
        %v1320 = vunpack.c.l.b16 %v1064
        %v1321 = vunpack.c.l.b16 %v1065
        %v1322 = vunpack.c.l.b16 %v1066
        %v1323 = vunpack.c.l.b16 %v1067
        %v1324 = vunpack.c.l.b16 %v1068
        %v1325 = vunpack.c.l.b16 %v1069
        %v1326 = vunpack.c.l.b16 %v1070
        %v1327 = vunpack.c.l.b16 %v1071
        %v1328 = vunpack.c.l.b16 %v1072
        %v1329 = vunpack.c.l.b16 %v1073
        %v1330 = vunpack.c.l.b16 %v1074
        %v1331 = vunpack.c.l.b16 %v1075
        %v1332 = vunpack.c.l.b16 %v1076
        %v1333 = vunpack.c.l.b16 %v1077
        %v1334 = vunpack.c.l.b16 %v1078
        %v1335 = vunpack.c.l.b16 %v1079
        %v1336 = vunpack.c.l.b16 %v1080
        %v1337 = vunpack.c.l.b16 %v1081
        %v1338 = vunpack.c.l.b16 %v1082
        %v1339 = vunpack.c.l.b16 %v1083
        %v1340 = vunpack.c.l.b16 %v1084
        %v1341 = vunpack.c.l.b16 %v1085
        %v1342 = vunpack.c.l.b16 %v1086
        %v1343 = vunpack.c.l.b16 %v1087
        %v1344 = vunpack.c.l.b16 %v1088
        %v1345 = vunpack.c.l.b16 %v1089
        %v1346 = vunpack.c.l.b16 %v1090
        %v1347 = vunpack.c.l.b16 %v1091
        %v1348 = vunpack.c.l.b16 %v1092
        %v1349 = vunpack.c.l.b16 %v1093
        %v1350 = vunpack.c.l.b16 %v1094
        %v1351 = vunpack.c.l.b16 %v1095
        %v1352 = vunpack.c.l.b16 %v1096
        %v1353 = vunpack.c.l.b16 %v1097
        %v1354 = vunpack.c.l.b16 %v1098
        %v1355 = vunpack.c.l.b16 %v1099
        %v1356 = vunpack.c.l.b16 %v1100
        %v1357 = vunpack.c.l.b16 %v1101
        %v1358 = vunpack.c.l.b16 %v1102
        %v1359 = vunpack.c.l.b16 %v1103
        %v1360 = vunpack.c.l.b16 %v1104
        %v1361 = vunpack.c.l.b16 %v1105
        %v1362 = vunpack.c.l.b16 %v1106
        %v1363 = vunpack.c.l.b16 %v1107
        %v1364 = vunpack.c.l.b16 %v1108
        %v1365 = vunpack.c.l.b16 %v1109
        %v1366 = vunpack.c.l.b16 %v1110
        %v1367 = vunpack.c.l.b16 %v1111
        %v1368 = vunpack.c.l.b16 %v1112
        %v1369 = vunpack.c.l.b16 %v1113
        %v1370 = vunpack.c.l.b16 %v1114
        %v1371 = vunpack.c.l.b16 %v1115
        %v1372 = vunpack.c.l.b16 %v1116
        %v1373 = vunpack.c.l.b16 %v1117
        %v1374 = vunpack.c.l.b16 %v1118
        %v1375 = vunpack.c.l.b16 %v1119
        %v1376 = vunpack.c.l.b16 %v1120
        %v1377 = vunpack.c.l.b16 %v1121
        %v1378 = vunpack.c.l.b16 %v1122
        %v1379 = vunpack.c.l.b16 %v1123
        %v1380 = vunpack.c.l.b16 %v1124
        %v1381 = vunpack.c.l.b16 %v1125
        %v1382 = vunpack.c.l.b16 %v1126
        %v1383 = vunpack.c.l.b16 %v1127
        %v1384 = vunpack.c.l.b16 %v1128
        %v1385 = vunpack.c.l.b16 %v1129
        %v1386 = vunpack.c.l.b16 %v1130
        %v1387 = vunpack.c.l.b16 %v1131
        %v1388 = vunpack.c.l.b16 %v1132
        %v1389 = vunpack.c.l.b16 %v1133
        %v1390 = vunpack.c.l.b16 %v1134
        %v1391 = vunpack.c.l.b16 %v1135
        %v1392 = vunpack.c.l.b16 %v1136
        %v1393 = vunpack.c.l.b16 %v1137
        %v1394 = vunpack.c.l.b16 %v1138
        %v1395 = vunpack.c.l.b16 %v1139
        %v1396 = vunpack.c.l.b16 %v1140
        %v1397 = vunpack.c.l.b16 %v1141
        %v1398 = vunpack.c.l.b16 %v1142
        %v1399 = vunpack.c.l.b16 %v1143
        %v1400 = vunpack.c.l.b16 %v1144
        %v1401 = vunpack.c.l.b16 %v1145
        %v1402 = vunpack.c.l.b16 %v1146
        %v1403 = vunpack.c.l.b16 %v1147
        %v1404 = vunpack.c.l.b16 %v1148
        %v1405 = vunpack.c.l.b16 %v1149
        %v1406 = vunpack.c.l.b16 %v1150
        %v1407 = vunpack.c.l.b16 %v1151
        %v1408 = vunpack.c.l.b16 %v1152
        %v1409 = vunpack.c.l.b16 %v1153
        %v1410 = vunpack.c.l.b16 %v1154
        %v1411 = vunpack.c.l.b16 %v1155
        %v1412 = vunpack.c.l.b16 %v1156
        %v1413 = vunpack.c.l.b16 %v1157
        %v1414 = vunpack.c.l.b16 %v1158
        %v1415 = vunpack.c.l.b16 %v1159
        %v1416 = vunpack.c.l.b16 %v1160
        %v1417 = vunpack.c.l.b16 %v1161
        %v1418 = vunpack.c.l.b16 %v1162
        %v1419 = vunpack.c.l.b16 %v1163
        %v1420 = vunpack.c.l.b16 %v1164
        %v1421 = vunpack.c.l.b16 %v1165
        %v1422 = vunpack.c.l.b16 %v1166
        %v1423 = vunpack.c.l.b16 %v1167
        %v1424 = vunpack.c.l.b16 %v1168
        %v1425 = vunpack.c.l.b16 %v1169
        %v1426 = vunpack.c.l.b16 %v1170
        %v1427 = vunpack.c.l.b16 %v1171
        %v1428 = vunpack.c.l.b16 %v1172
        %v1429 = vunpack.c.l.b16 %v1173
        %v1430 = vunpack.c.l.b16 %v1174
        %v1431 = vunpack.c.l.b16 %v1175
        %v1432 = vunpack.c.l.b16 %v1176
        %v1433 = vunpack.c.l.b16 %v1177
        %v1434 = vunpack.c.l.b16 %v1178
        %v1435 = vunpack.c.l.b16 %v1179
        %v1436 = vunpack.c.l.b16 %v1180
        %v1437 = vunpack.c.l.b16 %v1181
        %v1438 = vunpack.c.l.b16 %v1182
        %v1439 = vunpack.c.l.b16 %v1183
        %v1440 = vunpack.c.l.b16 %v1184
        %v1441 = vpack.c.b16 %v1314, %v1313
        %v1442 = vpack.c.b16 %v1316, %v1315
        %v1443 = vpack.c.b16 %v1318, %v1317
        %v1444 = vpack.c.b16 %v1320, %v1319
        %v1445 = vpack.c.b16 %v1322, %v1321
        %v1446 = vpack.c.b16 %v1324, %v1323
        %v1447 = vpack.c.b16 %v1326, %v1325
        %v1448 = vpack.c.b16 %v1328, %v1327
        %v1449 = vpack.c.b16 %v1330, %v1329
        %v1450 = vpack.c.b16 %v1332, %v1331
        %v1451 = vpack.c.b16 %v1334, %v1333
        %v1452 = vpack.c.b16 %v1336, %v1335
        %v1453 = vpack.c.b16 %v1338, %v1337
        %v1454 = vpack.c.b16 %v1340, %v1339
        %v1455 = vpack.c.b16 %v1342, %v1341
        %v1456 = vpack.c.b16 %v1344, %v1343
        %v1457 = vpack.c.b16 %v1346, %v1345
        %v1458 = vpack.c.b16 %v1348, %v1347
        %v1459 = vpack.c.b16 %v1350, %v1349
        %v1460 = vpack.c.b16 %v1352, %v1351
        %v1461 = vpack.c.b16 %v1354, %v1353
        %v1462 = vpack.c.b16 %v1356, %v1355
        %v1463 = vpack.c.b16 %v1358, %v1357
        %v1464 = vpack.c.b16 %v1360, %v1359
        %v1465 = vpack.c.b16 %v1362, %v1361
        %v1466 = vpack.c.b16 %v1364, %v1363
        %v1467 = vpack.c.b16 %v1366, %v1365
        %v1468 = vpack.c.b16 %v1368, %v1367
        %v1469 = vpack.c.b16 %v1370, %v1369
        %v1470 = vpack.c.b16 %v1372, %v1371
        %v1471 = vpack.c.b16 %v1374, %v1373
        %v1472 = vpack.c.b16 %v1376, %v1375
        %v1473 = vpack.c.b16 %v1378, %v1377
        %v1474 = vpack.c.b16 %v1380, %v1379
        %v1475 = vpack.c.b16 %v1382, %v1381
        %v1476 = vpack.c.b16 %v1384, %v1383
        %v1477 = vpack.c.b16 %v1386, %v1385
        %v1478 = vpack.c.b16 %v1388, %v1387
        %v1479 = vpack.c.b16 %v1390, %v1389
        %v1480 = vpack.c.b16 %v1392, %v1391
        %v1481 = vpack.c.b16 %v1394, %v1393
        %v1482 = vpack.c.b16 %v1396, %v1395
        %v1483 = vpack.c.b16 %v1398, %v1397
        %v1484 = vpack.c.b16 %v1400, %v1399
        %v1485 = vpack.c.b16 %v1402, %v1401
        %v1486 = vpack.c.b16 %v1404, %v1403
        %v1487 = vpack.c.b16 %v1406, %v1405
        %v1488 = vpack.c.b16 %v1408, %v1407
        %v1489 = vpack.c.b16 %v1410, %v1409
        %v1490 = vpack.c.b16 %v1412, %v1411
        %v1491 = vpack.c.b16 %v1414, %v1413
        %v1492 = vpack.c.b16 %v1416, %v1415
        %v1493 = vpack.c.b16 %v1418, %v1417
        %v1494 = vpack.c.b16 %v1420, %v1419
        %v1495 = vpack.c.b16 %v1422, %v1421
        %v1496 = vpack.c.b16 %v1424, %v1423
        %v1497 = vpack.c.b16 %v1426, %v1425
        %v1498 = vpack.c.b16 %v1428, %v1427
        %v1499 = vpack.c.b16 %v1430, %v1429
        %v1500 = vpack.c.b16 %v1432, %v1431
        %v1501 = vpack.c.b16 %v1434, %v1433
        %v1502 = vpack.c.b16 %v1436, %v1435
        %v1503 = vpack.c.b16 %v1438, %v1437
        %v1504 = vpack.c.b16 %v1440, %v1439
        %1569 = vmatprep.subr.bf16.mxu0 0
        %1570 = vmatpush1.bf16.msra.mxu0 %v1441
        %1571 = vmatprep.subr.bf16.mxu0 0
        %1572 = vmatpush1.bf16.msra.mxu0 %v1442
        %1573 = vmatprep.subr.bf16.mxu0 0
        %1574 = vmatpush1.bf16.msra.mxu0 %v1443
        %1575 = vmatprep.subr.bf16.mxu0 0
        %1576 = vmatpush1.bf16.msra.mxu0 %v1444
        %1577 = vmatprep.subr.bf16.mxu0 0
        %1578 = vmatpush1.bf16.msra.mxu0 %v1445
        %1579 = vmatprep.subr.bf16.mxu0 0
        %1580 = vmatpush1.bf16.msra.mxu0 %v1446
        %1581 = vmatprep.subr.bf16.mxu0 0
        %1582 = vmatpush1.bf16.msra.mxu0 %v1447
        %1583 = vmatprep.subr.bf16.mxu0 0
        %1584 = vmatpush1.bf16.msra.mxu0 %v1448
        %1585 = vmatprep.subr.bf16.mxu0 0
        %1586 = vmatpush1.bf16.msra.mxu0 %v1449
        %1587 = vmatprep.subr.bf16.mxu0 0
        %1588 = vmatpush1.bf16.msra.mxu0 %v1450
        %1589 = vmatprep.subr.bf16.mxu0 0
        %1590 = vmatpush1.bf16.msra.mxu0 %v1451
        %1591 = vmatprep.subr.bf16.mxu0 0
        %1592 = vmatpush1.bf16.msra.mxu0 %v1452
        %1593 = vmatprep.subr.bf16.mxu0 0
        %1594 = vmatpush1.bf16.msra.mxu0 %v1453
        %1595 = vmatprep.subr.bf16.mxu0 0
        %1596 = vmatpush1.bf16.msra.mxu0 %v1454
        %1597 = vmatprep.subr.bf16.mxu0 0
        %1598 = vmatpush1.bf16.msra.mxu0 %v1455
        %1599 = vmatprep.subr.bf16.mxu0 0
        %1600 = vmatpush1.bf16.msra.mxu0 %v1456
        %1601 = vmatprep.mubr.bf16.mxu0 %v1050
        %1602 = vmatmul.mubr.bf16.gmra.mrb[0].mxu0 %v1049
        %v1603 = vpop.f32.mrb[0].mxu0
        %v1604 = vadd.f32 %v584, %v1603
        %v1605 = vpop.f32.mrb[0].mxu0
        %v1606 = vpop.f32.mrb[0].mxu0
        %v1607 = vpop.f32.mrb[0].mxu0
        %1608 = vdwg.mxu0
        %1609 = vmatprep.subr.bf16.mxu0 0
        %1610 = vmatpush1.bf16.msra.mxu0 %v1457
        %1611 = vmatprep.subr.bf16.mxu0 0
        %1612 = vmatpush1.bf16.msra.mxu0 %v1458
        %1613 = vmatprep.subr.bf16.mxu0 0
        %1614 = vmatpush1.bf16.msra.mxu0 %v1459
        %1615 = vmatprep.subr.bf16.mxu0 0
        %1616 = vmatpush1.bf16.msra.mxu0 %v1460
        %1617 = vmatprep.subr.bf16.mxu0 0
        %1618 = vmatpush1.bf16.msra.mxu0 %v1461
        %1619 = vmatprep.subr.bf16.mxu0 0
        %1620 = vmatpush1.bf16.msra.mxu0 %v1462
        %1621 = vmatprep.subr.bf16.mxu0 0
        %1622 = vmatpush1.bf16.msra.mxu0 %v1463
        %1623 = vmatprep.subr.bf16.mxu0 0
        %1624 = vmatpush1.bf16.msra.mxu0 %v1464
        %1625 = vmatprep.subr.bf16.mxu0 0
        %1626 = vmatpush1.bf16.msra.mxu0 %v1465
        %1627 = vmatprep.subr.bf16.mxu0 0
        %1628 = vmatpush1.bf16.msra.mxu0 %v1466
        %1629 = vmatprep.subr.bf16.mxu0 0
        %1630 = vmatpush1.bf16.msra.mxu0 %v1467
        %1631 = vmatprep.subr.bf16.mxu0 0
        %1632 = vmatpush1.bf16.msra.mxu0 %v1468
        %1633 = vmatprep.subr.bf16.mxu0 0
        %1634 = vmatpush1.bf16.msra.mxu0 %v1469
        %1635 = vmatprep.subr.bf16.mxu0 0
        %1636 = vmatpush1.bf16.msra.mxu0 %v1470
        %1637 = vmatprep.subr.bf16.mxu0 0
        %1638 = vmatpush1.bf16.msra.mxu0 %v1471
        %1639 = vmatprep.subr.bf16.mxu0 0
        %1640 = vmatpush1.bf16.msra.mxu0 %v1472
        %1641 = vmatprep.mubr.bf16.mxu0 %v1052
        %1642 = vmatmul.mubr.bf16.gmra.mrb[0].mxu0 %v1051
        %v1643 = vpop.f32.mrb[0].mxu0
        %v1644 = vadd.f32 %v1604, %v1643
        %v1645 = vpop.f32.mrb[0].mxu0
        %v1646 = vpop.f32.mrb[0].mxu0
        %v1647 = vpop.f32.mrb[0].mxu0
        %1648 = vdwg.mxu0
        %1649 = vmatprep.subr.bf16.mxu0 0
        %1650 = vmatpush1.bf16.msra.mxu0 %v1473
        %1651 = vmatprep.subr.bf16.mxu0 0
        %1652 = vmatpush1.bf16.msra.mxu0 %v1474
        %1653 = vmatprep.subr.bf16.mxu0 0
        %1654 = vmatpush1.bf16.msra.mxu0 %v1475
        %1655 = vmatprep.subr.bf16.mxu0 0
        %1656 = vmatpush1.bf16.msra.mxu0 %v1476
        %1657 = vmatprep.subr.bf16.mxu0 0
        %1658 = vmatpush1.bf16.msra.mxu0 %v1477
        %1659 = vmatprep.subr.bf16.mxu0 0
        %1660 = vmatpush1.bf16.msra.mxu0 %v1478
        %1661 = vmatprep.subr.bf16.mxu0 0
        %1662 = vmatpush1.bf16.msra.mxu0 %v1479
        %1663 = vmatprep.subr.bf16.mxu0 0
        %1664 = vmatpush1.bf16.msra.mxu0 %v1480
        %1665 = vmatprep.subr.bf16.mxu0 0
        %1666 = vmatpush1.bf16.msra.mxu0 %v1481
        %1667 = vmatprep.subr.bf16.mxu0 0
        %1668 = vmatpush1.bf16.msra.mxu0 %v1482
        %1669 = vmatprep.subr.bf16.mxu0 0
        %1670 = vmatpush1.bf16.msra.mxu0 %v1483
        %1671 = vmatprep.subr.bf16.mxu0 0
        %1672 = vmatpush1.bf16.msra.mxu0 %v1484
        %1673 = vmatprep.subr.bf16.mxu0 0
        %1674 = vmatpush1.bf16.msra.mxu0 %v1485
        %1675 = vmatprep.subr.bf16.mxu0 0
        %1676 = vmatpush1.bf16.msra.mxu0 %v1486
        %1677 = vmatprep.subr.bf16.mxu0 0
        %1678 = vmatpush1.bf16.msra.mxu0 %v1487
        %1679 = vmatprep.subr.bf16.mxu0 0
        %1680 = vmatpush1.bf16.msra.mxu0 %v1488
        %1681 = vmatprep.mubr.bf16.mxu0 %v1054
        %1682 = vmatmul.mubr.bf16.gmra.mrb[0].mxu0 %v1053
        %v1683 = vpop.f32.mrb[0].mxu0
        %v1684 = vadd.f32 %v1644, %v1683
        %v1685 = vpop.f32.mrb[0].mxu0
        %v1686 = vpop.f32.mrb[0].mxu0
        %v1687 = vpop.f32.mrb[0].mxu0
        %1688 = vdwg.mxu0
        %1689 = vmatprep.subr.bf16.mxu0 0
        %1690 = vmatpush1.bf16.msra.mxu0 %v1489
        %1691 = vmatprep.subr.bf16.mxu0 0
        %1692 = vmatpush1.bf16.msra.mxu0 %v1490
        %1693 = vmatprep.subr.bf16.mxu0 0
        %1694 = vmatpush1.bf16.msra.mxu0 %v1491
        %1695 = vmatprep.subr.bf16.mxu0 0
        %1696 = vmatpush1.bf16.msra.mxu0 %v1492
        %1697 = vmatprep.subr.bf16.mxu0 0
        %1698 = vmatpush1.bf16.msra.mxu0 %v1493
        %1699 = vmatprep.subr.bf16.mxu0 0
        %1700 = vmatpush1.bf16.msra.mxu0 %v1494
        %1701 = vmatprep.subr.bf16.mxu0 0
        %1702 = vmatpush1.bf16.msra.mxu0 %v1495
        %1703 = vmatprep.subr.bf16.mxu0 0
        %1704 = vmatpush1.bf16.msra.mxu0 %v1496
        %1705 = vmatprep.subr.bf16.mxu0 0
        %1706 = vmatpush1.bf16.msra.mxu0 %v1497
        %1707 = vmatprep.subr.bf16.mxu0 0
        %1708 = vmatpush1.bf16.msra.mxu0 %v1498
        %1709 = vmatprep.subr.bf16.mxu0 0
        %1710 = vmatpush1.bf16.msra.mxu0 %v1499
        %1711 = vmatprep.subr.bf16.mxu0 0
        %1712 = vmatpush1.bf16.msra.mxu0 %v1500
        %1713 = vmatprep.subr.bf16.mxu0 0
        %1714 = vmatpush1.bf16.msra.mxu0 %v1501
        %1715 = vmatprep.subr.bf16.mxu0 0
        %1716 = vmatpush1.bf16.msra.mxu0 %v1502
        %1717 = vmatprep.subr.bf16.mxu0 0
        %1718 = vmatpush1.bf16.msra.mxu0 %v1503
        %1719 = vmatprep.subr.bf16.mxu0 0
        %1720 = vmatpush1.bf16.msra.mxu0 %v1504
        %1721 = vmatprep.mubr.bf16.mxu0 %v1056
        %1722 = vmatmul.mubr.bf16.gmra.mrb[0].mxu0 %v1055
        %v1723 = vpop.f32.mrb[0].mxu0
        %v1724 = vadd.f32 %v1684, %v1723
        %v1725 = vpop.f32.mrb[0].mxu0
        %v1726 = vpop.f32.mrb[0].mxu0
        %v1727 = vpop.f32.mrb[0].mxu0
        %1728 = vdwg.mxu0
        %v1729 = vlaneseq
        %v1730 = vshrl.u32 %v1729, 7
        %v1731 = vsub.s32 0, %v1730
        %v1732 = vrot.slane %v502, %v1731
        %v1733 = vadd.f32 %v1724, %v1732
        %v1734 = vmax.f32 %v1733, 0.0
        %v1735 = vpack.c.bf16 %v1734, %v1734
        %v1736 = vld [vmem:[#allocation11] sm:$0xf]
        %v1737 = vld [vmem:[#allocation11 + $0x4] sm:$0xf]
        %v1738 = vld [vmem:[#allocation11 + $0x8] sm:$0xf]
        %v1739 = vld [vmem:[#allocation11 + $0xc] sm:$0xf]
        %v1740 = vld [vmem:[#allocation11 + $0x10] sm:$0xf]
        %v1741 = vld [vmem:[#allocation11 + $0x14] sm:$0xf]
        %v1742 = vld [vmem:[#allocation11 + $0x18] sm:$0xf]
        %v1743 = vld [vmem:[#allocation11 + $0x1c] sm:$0xf]
        %v1744 = vld [vmem:[#allocation11 + $0x20] sm:$0xf]
        %v1745 = vld [vmem:[#allocation11 + $0x24] sm:$0xf]
        %v1746 = vld [vmem:[#allocation11 + $0x28] sm:$0xf]
        %v1747 = vld [vmem:[#allocation11 + $0x2c] sm:$0xf]
        %v1748 = vld [vmem:[#allocation11 + $0x30] sm:$0xf]
        %v1749 = vld [vmem:[#allocation11 + $0x34] sm:$0xf]
        %v1750 = vld [vmem:[#allocation11 + $0x38] sm:$0xf]
        %v1751 = vld [vmem:[#allocation11 + $0x3c] sm:$0xf]
        %v1752 = vlaneseq
        %v1753 = vshrl.u32 %v1752, 7
        %v1754 = vsub.s32 1, %v1753
        %v1755 = vrot.slane %v502, %v1754
        %v1772 = vunpack.c.l.b16 %v1736
        %v1773 = vunpack.c.l.b16 %v1737
        %v1774 = vunpack.c.l.b16 %v1738
        %v1775 = vunpack.c.l.b16 %v1739
        %v1776 = vunpack.c.l.b16 %v1740
        %v1777 = vunpack.c.l.b16 %v1741
        %v1778 = vunpack.c.l.b16 %v1742
        %v1779 = vunpack.c.l.b16 %v1743
        %v1780 = vunpack.c.l.b16 %v1744
        %v1781 = vunpack.c.l.b16 %v1745
        %v1782 = vunpack.c.l.b16 %v1746
        %v1783 = vunpack.c.l.b16 %v1747
        %v1784 = vunpack.c.l.b16 %v1748
        %v1785 = vunpack.c.l.b16 %v1749
        %v1786 = vunpack.c.l.b16 %v1750
        %v1787 = vunpack.c.l.b16 %v1751
        %v1788 = vpack.c.b16 %v1773, %v1772
        %v1789 = vpack.c.b16 %v1775, %v1774
        %v1790 = vpack.c.b16 %v1777, %v1776
        %v1791 = vpack.c.b16 %v1779, %v1778
        %v1792 = vpack.c.b16 %v1781, %v1780
        %v1793 = vpack.c.b16 %v1783, %v1782
        %v1794 = vpack.c.b16 %v1785, %v1784
        %v1795 = vpack.c.b16 %v1787, %v1786
        %1804 = vmatprep.subr.bf16.mxu0 0
        %1805 = vmatpush1.bf16.msra.mxu0 %v1788
        %1806 = vmatprep.subr.bf16.mxu0 0
        %1807 = vmatpush1.bf16.msra.mxu0 %v1789
        %1808 = vmatprep.subr.bf16.mxu0 0
        %1809 = vmatpush1.bf16.msra.mxu0 %v1790
        %1810 = vmatprep.subr.bf16.mxu0 0
        %1811 = vmatpush1.bf16.msra.mxu0 %v1791
        %1812 = vmatprep.subr.bf16.mxu0 0
        %1813 = vmatpush1.bf16.msra.mxu0 %v1792
        %1814 = vmatprep.subr.bf16.mxu0 0
        %1815 = vmatpush1.bf16.msra.mxu0 %v1793
        %1816 = vmatprep.subr.bf16.mxu0 0
        %1817 = vmatpush1.bf16.msra.mxu0 %v1794
        %1818 = vmatprep.subr.bf16.mxu0 0
        %1819 = vmatpush1.bf16.msra.mxu0 %v1795
        %1820 = vmatprep.subr.bf16.mxu0 0
        %1821 = vmatpush1.bf16.msra.mxu0 0
        %1822 = vmatprep.subr.bf16.mxu0 0
        %1823 = vmatpush1.bf16.msra.mxu0 0
        %1824 = vmatprep.subr.bf16.mxu0 0
        %1825 = vmatpush1.bf16.msra.mxu0 0
        %1826 = vmatprep.subr.bf16.mxu0 0
        %1827 = vmatpush1.bf16.msra.mxu0 0
        %1828 = vmatprep.subr.bf16.mxu0 0
        %1829 = vmatpush1.bf16.msra.mxu0 0
        %1830 = vmatprep.subr.bf16.mxu0 0
        %1831 = vmatpush1.bf16.msra.mxu0 0
        %1832 = vmatprep.subr.bf16.mxu0 0
        %1833 = vmatpush1.bf16.msra.mxu0 0
        %1834 = vmatprep.subr.bf16.mxu0 0
        %1835 = vmatpush1.bf16.msra.mxu0 0
        %1836 = vmatprep.mubr.bf16.mxu0 0
        %1837 = vmatmul.mubr.bf16.gmra.mrb[0].mxu0 %v1735
        %v1838 = vpop.f32.mrb[0].mxu0
        %v1839 = vadd.f32 %v1755, %v1838
        %v1840 = vpop.f32.mrb[0].mxu0
        %v1841 = vpop.f32.mrb[0].mxu0
        %v1842 = vpop.f32.mrb[0].mxu0
        %1843 = vdwg.mxu0
        %v1844 = vmax.f32 %v1839, 0.0
        %v1845 = vpack.c.bf16 %v1844, %v1844
        %v1846 = vld [vmem:[#allocation13] sm:$0xf]
        %v1847 = vld [vmem:[#allocation13 + $0x4] sm:$0xf]
        %v1848 = vld [vmem:[#allocation13 + $0x8] sm:$0xf]
        %v1849 = vld [vmem:[#allocation13 + $0xc] sm:$0xf]
        %v1850 = vld [vmem:[#allocation13 + $0x10] sm:$0xf]
        %v1851 = vld [vmem:[#allocation13 + $0x14] sm:$0xf]
        %v1852 = vld [vmem:[#allocation13 + $0x18] sm:$0xf]
        %v1853 = vld [vmem:[#allocation13 + $0x1c] sm:$0xf]
        %v1854 = vld [vmem:[#allocation13 + $0x20] sm:$0xf]
        %v1855 = vld [vmem:[#allocation13 + $0x24] sm:$0xf]
        %v1856 = vld [vmem:[#allocation13 + $0x28] sm:$0xf]
        %v1857 = vld [vmem:[#allocation13 + $0x2c] sm:$0xf]
        %v1858 = vld [vmem:[#allocation13 + $0x30] sm:$0xf]
        %v1859 = vld [vmem:[#allocation13 + $0x34] sm:$0xf]
        %v1860 = vld [vmem:[#allocation13 + $0x38] sm:$0xf]
        %v1861 = vld [vmem:[#allocation13 + $0x3c] sm:$0xf]
        %v1862 = vlaneseq
        %v1863 = vshrl.u32 %v1862, 7
        %v1864 = vsub.s32 2, %v1863
        %v1865 = vrot.slane %v502, %v1864
        %v1882 = vunpack.c.l.b16 %v1846
        %v1883 = vunpack.c.l.b16 %v1847
        %v1884 = vunpack.c.l.b16 %v1848
        %v1885 = vunpack.c.l.b16 %v1849
        %v1886 = vunpack.c.l.b16 %v1850
        %v1887 = vunpack.c.l.b16 %v1851
        %v1888 = vunpack.c.l.b16 %v1852
        %v1889 = vunpack.c.l.b16 %v1853
        %v1890 = vunpack.c.l.b16 %v1854
        %v1891 = vunpack.c.l.b16 %v1855
        %v1892 = vunpack.c.l.b16 %v1856
        %v1893 = vunpack.c.l.b16 %v1857
        %v1894 = vunpack.c.l.b16 %v1858
        %v1895 = vunpack.c.l.b16 %v1859
        %v1896 = vunpack.c.l.b16 %v1860
        %v1897 = vunpack.c.l.b16 %v1861
        %v1898 = vpack.c.b16 %v1883, %v1882
        %v1899 = vpack.c.b16 %v1885, %v1884
        %v1900 = vpack.c.b16 %v1887, %v1886
        %v1901 = vpack.c.b16 %v1889, %v1888
        %v1902 = vpack.c.b16 %v1891, %v1890
        %v1903 = vpack.c.b16 %v1893, %v1892
        %v1904 = vpack.c.b16 %v1895, %v1894
        %v1905 = vpack.c.b16 %v1897, %v1896
        %1914 = vmatprep.subr.bf16.mxu0 0
        %1915 = vmatpush1.bf16.msra.mxu0 %v1898
        %1916 = vmatprep.subr.bf16.mxu0 0
        %1917 = vmatpush1.bf16.msra.mxu0 %v1899
        %1918 = vmatprep.subr.bf16.mxu0 0
        %1919 = vmatpush1.bf16.msra.mxu0 %v1900
        %1920 = vmatprep.subr.bf16.mxu0 0
        %1921 = vmatpush1.bf16.msra.mxu0 %v1901
        %1922 = vmatprep.subr.bf16.mxu0 0
        %1923 = vmatpush1.bf16.msra.mxu0 %v1902
        %1924 = vmatprep.subr.bf16.mxu0 0
        %1925 = vmatpush1.bf16.msra.mxu0 %v1903
        %1926 = vmatprep.subr.bf16.mxu0 0
        %1927 = vmatpush1.bf16.msra.mxu0 %v1904
        %1928 = vmatprep.subr.bf16.mxu0 0
        %1929 = vmatpush1.bf16.msra.mxu0 %v1905
        %1930 = vmatprep.subr.bf16.mxu0 0
        %1931 = vmatpush1.bf16.msra.mxu0 0
        %1932 = vmatprep.subr.bf16.mxu0 0
        %1933 = vmatpush1.bf16.msra.mxu0 0
        %1934 = vmatprep.subr.bf16.mxu0 0
        %1935 = vmatpush1.bf16.msra.mxu0 0
        %1936 = vmatprep.subr.bf16.mxu0 0
        %1937 = vmatpush1.bf16.msra.mxu0 0
        %1938 = vmatprep.subr.bf16.mxu0 0
        %1939 = vmatpush1.bf16.msra.mxu0 0
        %1940 = vmatprep.subr.bf16.mxu0 0
        %1941 = vmatpush1.bf16.msra.mxu0 0
        %1942 = vmatprep.subr.bf16.mxu0 0
        %1943 = vmatpush1.bf16.msra.mxu0 0
        %1944 = vmatprep.subr.bf16.mxu0 0
        %1945 = vmatpush1.bf16.msra.mxu0 0
        %1946 = vmatprep.mubr.bf16.mxu0 0
        %1947 = vmatmul.mubr.bf16.gmra.mrb[0].mxu0 %v1845
        %v1948 = vpop.f32.mrb[0].mxu0
        %v1949 = vadd.f32 %v1865, %v1948
        %v1950 = vpop.f32.mrb[0].mxu0
        %v1951 = vpop.f32.mrb[0].mxu0
        %v1952 = vpop.f32.mrb[0].mxu0
        %1953 = vdwg.mxu0
        %v1954 = vmax.f32 %v1949, 0.0
        %v1955 = vpack.c.bf16 %v1954, %v1954
        %v1956 = vld [vmem:[#allocation14] sm:$0xf]
        %v1957 = vld [vmem:[#allocation14 + $0x4] sm:$0xf]
        %v1958 = vld [vmem:[#allocation14 + $0x8] sm:$0xf]
        %v1959 = vld [vmem:[#allocation14 + $0xc] sm:$0xf]
        %v1960 = vld [vmem:[#allocation14 + $0x10] sm:$0xf]
        %v1961 = vld [vmem:[#allocation14 + $0x14] sm:$0xf]
        %v1962 = vld [vmem:[#allocation14 + $0x18] sm:$0xf]
        %v1963 = vld [vmem:[#allocation14 + $0x1c] sm:$0xf]
        %v1964 = vld [vmem:[#allocation14 + $0x20] sm:$0xf]
        %v1965 = vld [vmem:[#allocation14 + $0x24] sm:$0xf]
        %v1966 = vld [vmem:[#allocation14 + $0x28] sm:$0xf]
        %v1967 = vld [vmem:[#allocation14 + $0x2c] sm:$0xf]
        %v1968 = vld [vmem:[#allocation14 + $0x30] sm:$0xf]
        %v1969 = vld [vmem:[#allocation14 + $0x34] sm:$0xf]
        %v1970 = vld [vmem:[#allocation14 + $0x38] sm:$0xf]
        %v1971 = vld [vmem:[#allocation14 + $0x3c] sm:$0xf]
        %v1972 = vlaneseq
        %v1973 = vshrl.u32 %v1972, 7
        %v1974 = vsub.s32 3, %v1973
        %v1975 = vrot.slane %v502, %v1974
        %v1992 = vunpack.c.l.b16 %v1956
        %v1993 = vunpack.c.l.b16 %v1957
        %v1994 = vunpack.c.l.b16 %v1958
        %v1995 = vunpack.c.l.b16 %v1959
        %v1996 = vunpack.c.l.b16 %v1960
        %v1997 = vunpack.c.l.b16 %v1961
        %v1998 = vunpack.c.l.b16 %v1962
        %v1999 = vunpack.c.l.b16 %v1963
        %v2000 = vunpack.c.l.b16 %v1964
        %v2001 = vunpack.c.l.b16 %v1965
        %v2002 = vunpack.c.l.b16 %v1966
        %v2003 = vunpack.c.l.b16 %v1967
        %v2004 = vunpack.c.l.b16 %v1968
        %v2005 = vunpack.c.l.b16 %v1969
        %v2006 = vunpack.c.l.b16 %v1970
        %v2007 = vunpack.c.l.b16 %v1971
        %v2008 = vpack.c.b16 %v1993, %v1992
        %v2009 = vpack.c.b16 %v1995, %v1994
        %v2010 = vpack.c.b16 %v1997, %v1996
        %v2011 = vpack.c.b16 %v1999, %v1998
        %v2012 = vpack.c.b16 %v2001, %v2000
        %v2013 = vpack.c.b16 %v2003, %v2002
        %v2014 = vpack.c.b16 %v2005, %v2004
        %v2015 = vpack.c.b16 %v2007, %v2006
        %2024 = vmatprep.subr.bf16.mxu0 0
        %2025 = vmatpush1.bf16.msra.mxu0 %v2008
        %2026 = vmatprep.subr.bf16.mxu0 0
        %2027 = vmatpush1.bf16.msra.mxu0 %v2009
        %2028 = vmatprep.subr.bf16.mxu0 0
        %2029 = vmatpush1.bf16.msra.mxu0 %v2010
        %2030 = vmatprep.subr.bf16.mxu0 0
        %2031 = vmatpush1.bf16.msra.mxu0 %v2011
        %2032 = vmatprep.subr.bf16.mxu0 0
        %2033 = vmatpush1.bf16.msra.mxu0 %v2012
        %2034 = vmatprep.subr.bf16.mxu0 0
        %2035 = vmatpush1.bf16.msra.mxu0 %v2013
        %2036 = vmatprep.subr.bf16.mxu0 0
        %2037 = vmatpush1.bf16.msra.mxu0 %v2014
        %2038 = vmatprep.subr.bf16.mxu0 0
        %2039 = vmatpush1.bf16.msra.mxu0 %v2015
        %2040 = vmatprep.subr.bf16.mxu0 0
        %2041 = vmatpush1.bf16.msra.mxu0 0
        %2042 = vmatprep.subr.bf16.mxu0 0
        %2043 = vmatpush1.bf16.msra.mxu0 0
        %2044 = vmatprep.subr.bf16.mxu0 0
        %2045 = vmatpush1.bf16.msra.mxu0 0
        %2046 = vmatprep.subr.bf16.mxu0 0
        %2047 = vmatpush1.bf16.msra.mxu0 0
        %2048 = vmatprep.subr.bf16.mxu0 0
        %2049 = vmatpush1.bf16.msra.mxu0 0
        %2050 = vmatprep.subr.bf16.mxu0 0
        %2051 = vmatpush1.bf16.msra.mxu0 0
        %2052 = vmatprep.subr.bf16.mxu0 0
        %2053 = vmatpush1.bf16.msra.mxu0 0
        %2054 = vmatprep.subr.bf16.mxu0 0
        %2055 = vmatpush1.bf16.msra.mxu0 0
        %2056 = vmatprep.mubr.bf16.mxu0 0
        %2057 = vmatmul.mubr.bf16.gmra.mrb[0].mxu0 %v1955
        %v2058 = vpop.f32.mrb[0].mxu0
        %v2059 = vadd.f32 %v1975, %v2058
        %v2060 = vpop.f32.mrb[0].mxu0
        %v2061 = vpop.f32.mrb[0].mxu0
        %v2062 = vpop.f32.mrb[0].mxu0
        %2063 = vdwg.mxu0
        %v2064 = vadd.f32 %v2059, %v586
        %2066 = vrot.lane.b32.xlu0 %v2064, 32
        %v2067 = vpop.permute.xlu0 %2066
        %v2069 = vmul.f32 %v586, %v2067
        %2070 = vrot.lane.b32.xlu0 %v2064, 64
        %v2071 = vpop.permute.xlu0 %2070
        %v2073 = vmul.f32 %v586, %v2071
        %2075 = vrot.lane.b32.xlu0 %v2073, 96
        %v2076 = vpop.permute.xlu0 %2075
        %v2078 = vadd.f32 %v2069, %v2076
        %2080 = vrot.lane.b32.xlu0 %v2078, 64
        %v2081 = vpop.permute.xlu0 %2080
        %v2083 = vmul.f32 %v586, %v2081
        %v2084 = vmul.f32 %v655, %v2064
        %2086 = vrot.lane.b32.xlu0 %v2084, 96
        %v2087 = vpop.permute.xlu0 %2086
        %v2089 = vadd.f32 %v2083, %v2087
        %2091 = vrot.lane.b32.xlu0 %v2089, 64
        %v2092 = vpop.permute.xlu0 %2091
        %v2094 = vmul.f32 %v655, %v2092
        %v2095 = vmul.f32 %v655, %v2071
        %2097 = vrot.lane.b32.xlu0 %v2095, 96
        %v2098 = vpop.permute.xlu0 %2097
        %v2100 = vadd.f32 %v2094, %v2098
        %2101 = vrot.lane.b32.xlu0 %v2089, 32
        %v2102 = vpop.permute.xlu0 %2101
        %vm2104 = vcmask 261120
        %2105 = vst.msk [vmem:[%s498] sm:$0xff] %vm2104, %v2102
        %vm2106 = vcmask 523520
        %2107 = vst.msk [vmem:[%s498] sm:$0xff] %vm2106, %v2100
        %vm2108 = vcmask 1048064
        %2109 = vst.msk [vmem:[%s498] sm:$0xff] %vm2108, 0.0
        %s2110 = sand.u32 %s261, 1
        %s2111 = scalar_lea.sflag [#allocation4], %s2110
        %s2112 = sand.u32 %s261, 1
        %s2113 = smul.addr %s2112, 8
        %s2114 = scalar_lea.vmem [#allocation16], %s2113
        // Predicated region
        $region93: #{tpu_custom_call.1} parent=59 // pred_check
          %p2115 = pneg %p271
        $region94: #{tpu_custom_call.1} parent=59 // pred_check_branch
          %2117 = sbr.rel (%p2115) target = $region96
        $region95: #{tpu_custom_call.1} parent=59 // pred_region
          %s2119 = ssub.s32 128, 128
          %2120 = vsyncadd %s2111, %s2119
          %s2121 = smul.addr %s33, 128
          %s2122 = scalar_lea.hbm %s10, %s2121
          %s2124 = sshll.u32 %s2114, 4
          %s2125 = int_to_ptr.vmem [resolvable:$true] %s2124
          %2127 = dma.vmem_to_hbm [thread:$0]  %s2125, 128, %s2122, %s2111
        $region96: #{tpu_custom_call.1} parent=59 // pred_fallthru
          _
      $region60: #{tpu_custom_call.1} parent=5 // pred_fallthru
        _
      %p2128 = scmp.le.s32.totalorder 2, %s28
      // Predicated region
      $region97: #{tpu_custom_call.1} parent=5 // pred_check
        %p2129 = pneg %p2128
      $region98: #{tpu_custom_call.1} parent=5 // pred_check_branch
        %2131 = sbr.rel (%p2129) target = $region100
      $region99: #{tpu_custom_call.1} parent=5 // pred_region
        %s2132 = ssub.s32 %s28, 2
        // Predicated region
        $region101: #{tpu_custom_call.1} parent=99 // pred_check
          %p2133 = pneg %p277
        $region102: #{tpu_custom_call.1} parent=99 // pred_check_branch
          %2135 = sbr.rel (%p2133) target = $region104
        $region103: #{tpu_custom_call.1} parent=99 // pred_region
          %s2136 = sand.u32 %s262, 1
          %s2137 = scalar_lea.sflag [#allocation4], %s2136
          %s2138 = sand.u32 %s262, 1
          %s2139 = smul.addr %s2138, 8
          %s2140 = scalar_lea.vmem [#allocation16], %s2139
          %2141 = dma.done %s2137, 128
        $region104: #{tpu_custom_call.1} parent=99 // pred_fallthru
          _
      $region100: #{tpu_custom_call.1} parent=5 // pred_fallthru
        _
    $region6: #{tpu_custom_call.1} parent=1 // loop_footer
      %s32 = sadd.s32 1, %s28
    $region7: #{tpu_custom_call.1} parent=1 // loop_footer_branch
      %27 = sbr.rel target = $region3
    $region8: #{tpu_custom_call.1} parent=1 // loop_exit
      _
    %2142 = vsyncpa [#allocation3], 1
    %s2143 = scalar_lea.sflag [#allocation3], 1
    %2144 = vsyncpa %s2143, 1
    %2145 = vsyncpa [#allocation6], 1
    %s2146 = scalar_lea.sflag [#allocation6], 1
    %2147 = vsyncpa %s2146, 1
    %2148 = vsyncpa [#allocation9], 1
    %2149 = vsyncpa [#allocation12], 1
    %2150 = vsyncpa [#allocation15], 1
    %2151 = vsyncpa [#allocation4], 1
    %s2152 = scalar_lea.sflag [#allocation4], 1
    %2153 = vsyncpa %s2152, 1

</llo_original>
